<compile_context>
chip_gen: v5e
topology: v5e:2x2
jax: 0.10.0
libtpu: 0.0.40
codegen_flags: <defaults>
</compile_context>

<pallas_src>
import functools

import jax
import jax.numpy as jnp
from jax.experimental import pallas as pl
from jax.experimental.pallas import tpu as pltpu


# ----------------------------------------------------------------------------
# Tiling helper
# ----------------------------------------------------------------------------
def _pick_tile(total, max_tile=8192, align=128):
    """Largest aligned divisor of `total` that is <= max_tile (else `total`)."""
    if total <= max_tile:
        return total
    t = (max_tile // align) * align
    while t >= align:
        if total % t == 0:
            return t
        t -= align
    return total  # fallback: single full block (always legal)


# ----------------------------------------------------------------------------
# Pallas kernels
# ----------------------------------------------------------------------------
def _conv1x1_kernel(x_ref, w_ref, b_ref, o_ref, *, apply_relu):
    """NCHW-native 1x1 conv tile: o = W @ x + b.

    x_ref: (1, C_in, T)   w_ref: (C_out, C_in)   b_ref: (C_out, 1)
    o_ref: (1, C_out, T)  -- T on the lane axis (lane-dense store).
    """
    acc = jnp.dot(w_ref[...], x_ref[0], preferred_element_type=jnp.float32)
    acc = acc + b_ref[...]
    if apply_relu:
        acc = jnp.maximum(acc, 0.0)
    o_ref[0] = acc.astype(o_ref.dtype)


def _fused_denoiser_kernel(sigma_ref, c_in_ref, c_skip_ref, c_out_ref, c_noise_ref,
                           tgt_ref, nz_ref, ft_ref,
                           w1y_ref, w1f_ref, w1n_ref, b1_ref, w2_ref, b2_ref,
                           dyn_ref, yn_ref):
    """Fused: noise add + EDM preconditioning + 2-layer 1x1-conv denoiser.

    Scalars (SMEM, shape (B,)): sigma, c_in, c_skip, c_out, c_noise.
    Tiles (VMEM): tgt/nz (1,3,T), ft (1,F,T).
    Weights (VMEM): w1y (H,3), w1f (H,F), w1n (H,1), b1 (H,1), w2 (3,H), b2 (3,1).
    Outputs: dyn (1,3,T) = D_yn tile, yn (1,3,T) = noisy target tile.
    """
    b = pl.program_id(0)
    sigma = sigma_ref[b]
    c_in = c_in_ref[b]
    c_skip = c_skip_ref[b]
    c_out = c_out_ref[b]
    c_noise = c_noise_ref[b]

    # yn = target + sigma * noise
    yn = tgt_ref[0] + sigma * nz_ref[0]                      # (3, T)
    yn_ref[0] = yn.astype(yn_ref.dtype)

    ft = ft_ref[0]                                           # (F, T)

    # x_in = c_in * [yn ; feat]   (never materialized in HBM)
    yn_s = (yn * c_in).astype(jnp.float32)
    ft_s = (ft * c_in).astype(jnp.float32)

    # conv1: split W1 -> no concat; c_noise channel folded into the bias.
    h = jnp.dot(w1y_ref[...], yn_s, preferred_element_type=jnp.float32)
    h = h + jnp.dot(w1f_ref[...], ft_s, preferred_element_type=jnp.float32)
    b1_eff = b1_ref[...] + c_noise * w1n_ref[...]            # (H, 1)
    h = jnp.maximum(h + b1_eff, 0.0)

    # conv2
    f = jnp.dot(w2_ref[...], h, preferred_element_type=jnp.float32) + b2_ref[...]

    # D = c_skip * yn + c_out * F(...)
    dyn_ref[0] = (c_skip * yn + c_out * f).astype(dyn_ref.dtype)


# ----------------------------------------------------------------------------
# Kernel wrappers
# ----------------------------------------------------------------------------
def conv1x1_nchw(x_nchw, w, b, *, apply_relu=False, max_tile=8192):
    """1x1 convolution on an NCHW tensor, computed natively as (Cout,Cin)@(Cin,HW)."""
    n, c_in, h, wd = x_nchw.shape
    c_out = w.shape[0]
    hw = h * wd
    t = _pick_tile(hw, max_tile)

    x3 = x_nchw.reshape(n, c_in, hw)          # free view, no transpose
    b2 = b.reshape(c_out, 1)

    out = pl.pallas_call(
        functools.partial(_conv1x1_kernel, apply_relu=apply_relu),
        out_shape=jax.ShapeDtypeStruct((n, c_out, hw), x_nchw.dtype),
        grid=(n, hw // t),
        in_specs=[
            pl.BlockSpec((1, c_in, t), lambda i, j: (i, 0, j)),
            pl.BlockSpec((c_out, c_in), lambda i, j: (0, 0)),
            pl.BlockSpec((c_out, 1), lambda i, j: (0, 0)),
        ],
        out_specs=pl.BlockSpec((1, c_out, t), lambda i, j: (i, 0, j)),
        compiler_params=pltpu.CompilerParams(
            dimension_semantics=("parallel", "parallel")),
    )(x3, w, b2)

    return out.reshape(n, c_out, h, wd)


def fused_edm_denoiser(params, target, noise_unit, feat, sigma, sigma_data,
                       *, max_tile=8192):
    """Fused noise-add + EDM-preconditioned 2-layer 1x1-conv denoiser.

    Returns (D_yn, yn), both shaped like `target` (B, 3, H, W).
    """
    bsz, _, h, wd = target.shape
    fdim = feat.shape[1]
    hid = params["den_w1"].shape[0]
    hw = h * wd
    t = _pick_tile(hw, max_tile)

    s = sigma.reshape(bsz).astype(jnp.float32)
    c_skip = (sigma_data ** 2) / (s ** 2 + sigma_data ** 2)
    c_out = s * sigma_data / jnp.sqrt(s ** 2 + sigma_data ** 2)
    c_in = 1.0 / jnp.sqrt(sigma_data ** 2 + s ** 2)
    c_noise = jnp.log(s) / 4.0

    w1 = params["den_w1"]                      # (hid, 3 + F + 1)
    w1_yn = w1[:, :3]
    w1_ft = w1[:, 3:3 + fdim]
    w1_nz = w1[:, 3 + fdim:3 + fdim + 1]
    b1 = params["den_b1"].reshape(hid, 1)
    w2 = params["den_w2"]                      # (3, hid)
    b2 = params["den_b2"].reshape(3, 1)

    tgt3 = target.reshape(bsz, 3, hw)
    nz3 = noise_unit.reshape(bsz, 3, hw)
    ft3 = feat.reshape(bsz, fdim, hw)

    smem_spec = pl.BlockSpec(memory_space=pltpu.MemorySpace.SMEM)

    def tile_spec(c):
        return pl.BlockSpec((1, c, t), lambda i, j: (i, 0, j))

    def w_spec(shape):
        return pl.BlockSpec(shape, lambda i, j: (0, 0))

    d_yn, yn = pl.pallas_call(
        _fused_denoiser_kernel,
        out_shape=(jax.ShapeDtypeStruct((bsz, 3, hw), target.dtype),
                   jax.ShapeDtypeStruct((bsz, 3, hw), target.dtype)),
        grid=(bsz, hw // t),
        in_specs=[
            smem_spec, smem_spec, smem_spec, smem_spec, smem_spec,
            tile_spec(3), tile_spec(3), tile_spec(fdim),
            w_spec((hid, 3)), w_spec((hid, fdim)), w_spec((hid, 1)),
            w_spec((hid, 1)), w_spec((3, hid)), w_spec((3, 1)),
        ],
        out_specs=(pl.BlockSpec((1, 3, t), lambda i, j: (i, 0, j)),
                   pl.BlockSpec((1, 3, t), lambda i, j: (i, 0, j))),
        compiler_params=pltpu.CompilerParams(
            dimension_semantics=("parallel", "parallel")),
    )(s, c_in, c_skip, c_out, c_noise,
      tgt3, nz3, ft3,
      w1_yn, w1_ft, w1_nz, b1, w2, b2)

    return d_yn.reshape(bsz, 3, h, wd), yn.reshape(bsz, 3, h, wd)


# ----------------------------------------------------------------------------
# Synthetic submodules (PixelNeRFNet stand-in + EDM denoiser stand-in)
# ----------------------------------------------------------------------------
def make_params(feat_dim=13, hidden=32, dtype=jnp.float32):
    keys = jax.random.split(jax.random.PRNGKey(42), 4)
    return {
        # pixel-nerf encoder: 3 -> feat_dim (1x1 conv, (Cout, Cin) layout)
        "enc_w": 0.1 * jax.random.normal(keys[0], (feat_dim, 3), dtype),
        "enc_b": jnp.zeros((feat_dim,), dtype),
        # pose embedding: flattened 4x4 pose -> feat_dim
        "pose_w": 0.1 * jax.random.normal(keys[1], (16, feat_dim), dtype),
        "pose_b": jnp.zeros((feat_dim,), dtype),
        # denoiser inner net F: (3 + feat_dim + 1[c_noise]) -> hidden -> 3
        "den_w1": 0.1 * jax.random.normal(keys[2], (hidden, 3 + feat_dim + 1), dtype),
        "den_b1": jnp.zeros((hidden,), dtype),
        "den_w2": 0.1 * jax.random.normal(keys[3], (3, hidden), dtype),
        "den_b2": jnp.zeros((3,), dtype),
    }


def pixel_nerf_features(params, input_imgs, input_poses, target_poses,
                        focal, z_near, z_far):
    """Stand-in for PixelNeRFNet: pixel-aligned 1x1-conv features averaged over
    input views, conditioned on the target pose via a small pose embedding.
    # TODO(synk): full volume-rendering PixelNeRF not reproduced (submodule not provided).
    """
    ns, niv, _, h, w = input_imgs.shape
    ntv = target_poses.shape[1]
    feat_dim = params["enc_w"].shape[0]

    # encode input views (hot path: Pallas NCHW-native 1x1-conv kernel)
    enc = conv1x1_nchw(input_imgs.reshape(ns * niv, 3, h, w),
                       params["enc_w"], params["enc_b"], apply_relu=True)
    enc = enc.reshape(ns, niv, feat_dim, h, w).mean(axis=1)           # (ns, F, H, W)

    # tiny pose embedding (glue, plain JAX)
    pose_flat = target_poses.reshape(ns * ntv, 16)
    scale = jnp.asarray(focal / max(z_far - z_near, 1e-6), input_imgs.dtype)
    pose_feat = jnp.tanh((pose_flat @ params["pose_w"] + params["pose_b"]) * scale)
    pose_feat = pose_feat.reshape(ns, ntv, feat_dim, 1, 1)

    feat = enc[:, None] + pose_feat                                    # (ns, ntv, F, H, W)
    return feat


# ----------------------------------------------------------------------------
# GeNVS forward pass
# ----------------------------------------------------------------------------
def genvs_forward(params, input_imgs, input_poses, target_imgs, target_poses,
                  focal, z_near, z_far, P_mean, P_std, sigma_data, key):
    ns, ntv, _, h, w = target_imgs.shape

    # PixelNeRF feature images
    feature_images = pixel_nerf_features(params, input_imgs, input_poses,
                                         target_poses, focal, z_near, z_far)
    feat_dim = feature_images.shape[2]
    feature_images = feature_images.reshape(-1, feat_dim, h, w)
    target_flat = target_imgs.reshape(-1, 3, h, w)
    bsz = target_flat.shape[0]

    k_sigma, k_noise, k_drop, k_feat = jax.random.split(key, 4)

    # EDM sigma / loss weight
    rnd_normal = jax.random.normal(k_sigma, (bsz, 1, 1, 1), target_flat.dtype)
    sigma = jnp.exp(rnd_normal * P_std + P_mean)
    weight = (sigma ** 2 + sigma_data ** 2) / (sigma * sigma_data) ** 2

    noise_unit = jax.random.normal(k_noise, target_flat.shape, target_flat.dtype)

    # TODO(synk): augment_pipe not provided -> identity augmentation.

    # 10% chance: replace conditioning features with pure noise (traced select,
    # no host sync, jit-friendly).
    drop = jax.random.uniform(k_drop, ())
    feat_noise = jax.random.normal(k_feat, feature_images.shape,
                                   feature_images.dtype)
    feature_images = jnp.where(drop <= 0.1, feat_noise, feature_images)

    # Fused: yn = target + sigma*noise, and D_yn = EDM denoiser([yn ; feat]).
    D_yn, yn = fused_edm_denoiser(params, target_flat, noise_unit,
                                  feature_images, sigma, sigma_data)

    D_yn = D_yn.reshape(ns, ntv, 3, h, w)
    feature_images = feature_images.reshape(ns, ntv, feat_dim, h, w)
    yn = yn.reshape(ns, ntv, 3, h, w)
    weight = weight.reshape(ns, ntv, 1, 1, 1)
    target_out = target_flat.reshape(ns, ntv, 3, h, w)
    return D_yn, feature_images, yn, weight, target_out


genvs_forward_jit = jax.jit(
    genvs_forward,
    static_argnames=("focal", "z_near", "z_far", "P_mean", "P_std", "sigma_data"))


# ----------------------------------------------------------------------------
if __name__ == "__main__":
    ns, niv, ntv, H, W = 2, 2, 2, 16, 16
    feat_dim, hidden = 13, 32

    key = jax.random.PRNGKey(0)
    k1, k2, k3, k4, k5 = jax.random.split(key, 5)

    input_imgs = jax.random.normal(k1, (ns, niv, 3, H, W), jnp.float32)
    input_poses = jax.random.normal(k2, (ns, niv, 4, 4), jnp.float32)
    target_imgs = jax.random.normal(k3, (ns, ntv, 3, H, W), jnp.float32)
    target_poses = jax.random.normal(k4, (ns, ntv, 4, 4), jnp.float32)

    params = make_params(feat_dim=feat_dim, hidden=hidden)

    outs = genvs_forward_jit(
        params, input_imgs, input_poses, target_imgs, target_poses,
        focal=1.2, z_near=0.8, z_far=1.8,
        P_mean=-1.2, P_std=1.2, sigma_data=0.5, key=k5)

    outs = jax.block_until_ready(outs)
    D_yn, feature_images, yn, weight, tgt = outs
    assert D_yn.shape == (ns, ntv, 3, H, W)
    assert feature_images.shape == (ns, ntv, feat_dim, H, W)
    assert yn.shape == (ns, ntv, 3, H, W)
    assert weight.shape == (ns, ntv, 1, 1, 1)
    assert tgt.shape == (ns, ntv, 3, H, W)
    assert all(bool(jnp.isfinite(x).all()) for x in (D_yn, feature_images, yn, weight, tgt))
    print("KERNEL_OK")
</pallas_src>

<mosaic_0001>
module attributes {stable_mosaic.version = 11 : i64} {
  func.func @_conv1x1_kernel(%arg0: i32, %arg1: i32, %arg2: memref<1x3x256xf32, #tpu.memory_space<vmem>>, %arg3: memref<13x3xf32, #tpu.memory_space<vmem>>, %arg4: memref<13x1xf32, #tpu.memory_space<vmem>>, %arg5: memref<1x13x256xf32, #tpu.memory_space<vmem>>) attributes {dimension_semantics = [#tpu.dimension_semantics<parallel>, #tpu.dimension_semantics<parallel>], iteration_bounds = array<i64: 4, 1>, scalar_prefetch = 0 : i64, scratch_operands = 0 : i64, tpu.core_type = #tpu.core_type<tc>, window_params = [{transform_indices = @transform_0, window_bounds = array<i64: 1, 3, 256>}, {pipeline_mode = #tpu.pipeline_mode<synchronous>, transform_indices = @transform_1, window_bounds = array<i64: 13, 3>}, {pipeline_mode = #tpu.pipeline_mode<synchronous>, transform_indices = @transform_2, window_bounds = array<i64: 13, 1>}, {transform_indices = @transform_3, window_bounds = array<i64: 1, 13, 256>}]} {
    %c0 = arith.constant 0 : index
    %c0_0 = arith.constant 0 : index
    %0 = vector.load %arg3[%c0, %c0_0] : memref<13x3xf32, #tpu.memory_space<vmem>>, vector<13x3xf32>
    %c0_1 = arith.constant 0 : index
    %c0_2 = arith.constant 0 : index
    %c0_3 = arith.constant 0 : index
    %1 = vector.load %arg2[%c0_1, %c0_2, %c0_3] : memref<1x3x256xf32, #tpu.memory_space<vmem>>, vector<1x3x256xf32>
    %2 = vector.shape_cast %1 : vector<1x3x256xf32> to vector<3x256xf32>
    %cst = arith.constant dense<0.000000e+00> : vector<13x256xf32>
    %3 = tpu.matmul %0, %2, %cst {dimension_numbers = #tpu.dot_dimension_numbers<[1], [0], [0], [1], [0, 0, 1, 1], [], []>} : vector<13x3xf32>, vector<3x256xf32>, vector<13x256xf32> -> vector<13x256xf32>
    %c0_4 = arith.constant 0 : index
    %c0_5 = arith.constant 0 : index
    %4 = vector.load %arg4[%c0_4, %c0_5] : memref<13x1xf32, #tpu.memory_space<vmem>>, vector<13x1xf32>
    %5 = vector.broadcast %4 : vector<13x1xf32> to vector<13x256xf32>
    %6 = arith.addf %3, %5 : vector<13x256xf32>
    %cst_6 = arith.constant 0.000000e+00 : f32
    %7 = vector.broadcast %cst_6 : f32 to vector<13x256xf32>
    %8 = arith.maximumf %6, %7 : vector<13x256xf32>
    %c0_7 = arith.constant 0 : index
    %c0_8 = arith.constant 0 : index
    %c0_9 = arith.constant 0 : index
    %9 = vector.load %arg5[%c0_7, %c0_8, %c0_9] : memref<1x13x256xf32, #tpu.memory_space<vmem>>, vector<1x13x256xf32>
    %10 = vector.shape_cast %9 : vector<1x13x256xf32> to vector<13x256xf32>
    %11 = vector.shape_cast %8 : vector<13x256xf32> to vector<1x13x256xf32>
    tpu.vector_store %arg5[%c0_7, %c0_8, %c0_9], %11 {strides = array<i32>} : memref<1x13x256xf32, #tpu.memory_space<vmem>>, vector<1x13x256xf32>,
    return
  }
  func.func @transform_0(%arg0: i32, %arg1: i32) -> (i32, i32, i32) {
    %c0_i32 = arith.constant 0 : i32
    %c0_i32_0 = arith.constant 0 : i32
    return %arg0, %c0_i32, %arg1 : i32, i32, i32
  }
  func.func @transform_1(%arg0: i32, %arg1: i32) -> (i32, i32) {
    %c0_i32 = arith.constant 0 : i32
    %c0_i32_0 = arith.constant 0 : i32
    %c0_i32_1 = arith.constant 0 : i32
    return %c0_i32, %c0_i32_0 : i32, i32
  }
  func.func @transform_2(%arg0: i32, %arg1: i32) -> (i32, i32) {
    %c0_i32 = arith.constant 0 : i32
    %c0_i32_0 = arith.constant 0 : i32
    %c0_i32_1 = arith.constant 0 : i32
    return %c0_i32, %c0_i32_0 : i32, i32
  }
  func.func @transform_3(%arg0: i32, %arg1: i32) -> (i32, i32, i32) {
    %c0_i32 = arith.constant 0 : i32
    %c0_i32_0 = arith.constant 0 : i32
    return %arg0, %c0_i32, %arg1 : i32, i32, i32
  }
}

module attributes {stable_mosaic.version = 11 : i64} {
  func.func @_fused_denoiser_kernel(%arg0: i32, %arg1: i32, %arg2: memref<4xf32, #tpu.memory_space<smem>>, %arg3: memref<4xf32, #tpu.memory_space<smem>>, %arg4: memref<4xf32, #tpu.memory_space<smem>>, %arg5: memref<4xf32, #tpu.memory_space<smem>>, %arg6: memref<4xf32, #tpu.memory_space<smem>>, %arg7: memref<1x3x256xf32, #tpu.memory_space<vmem>>, %arg8: memref<1x3x256xf32, #tpu.memory_space<vmem>>, %arg9: memref<1x13x256xf32, #tpu.memory_space<vmem>>, %arg10: memref<32x3xf32, #tpu.memory_space<vmem>>, %arg11: memref<32x13xf32, #tpu.memory_space<vmem>>, %arg12: memref<32x1xf32, #tpu.memory_space<vmem>>, %arg13: memref<32x1xf32, #tpu.memory_space<vmem>>, %arg14: memref<3x32xf32, #tpu.memory_space<vmem>>, %arg15: memref<3x1xf32, #tpu.memory_space<vmem>>, %arg16: memref<1x3x256xf32, #tpu.memory_space<vmem>>, %arg17: memref<1x3x256xf32, #tpu.memory_space<vmem>>) attributes {dimension_semantics = [#tpu.dimension_semantics<parallel>, #tpu.dimension_semantics<parallel>], iteration_bounds = array<i64: 4, 1>, scalar_prefetch = 0 : i64, scratch_operands = 0 : i64, tpu.core_type = #tpu.core_type<tc>, window_params = [{transform_indices = @transform_0, window_bounds = array<i64: 4>}, {transform_indices = @transform_1, window_bounds = array<i64: 4>}, {transform_indices = @transform_2, window_bounds = array<i64: 4>}, {transform_indices = @transform_3, window_bounds = array<i64: 4>}, {transform_indices = @transform_4, window_bounds = array<i64: 4>}, {transform_indices = @transform_5, window_bounds = array<i64: 1, 3, 256>}, {transform_indices = @transform_6, window_bounds = array<i64: 1, 3, 256>}, {transform_indices = @transform_7, window_bounds = array<i64: 1, 13, 256>}, {pipeline_mode = #tpu.pipeline_mode<synchronous>, transform_indices = @transform_8, window_bounds = array<i64: 32, 3>}, {pipeline_mode = #tpu.pipeline_mode<synchronous>, transform_indices = @transform_9, window_bounds = array<i64: 32, 13>}, {pipeline_mode = #tpu.pipeline_mode<synchronous>, transform_indices = @transform_10, window_bounds = array<i64: 32, 1>}, {pipeline_mode = #tpu.pipeline_mode<synchronous>, transform_indices = @transform_11, window_bounds = array<i64: 32, 1>}, {pipeline_mode = #tpu.pipeline_mode<synchronous>, transform_indices = @transform_12, window_bounds = array<i64: 3, 32>}, {pipeline_mode = #tpu.pipeline_mode<synchronous>, transform_indices = @transform_13, window_bounds = array<i64: 3, 1>}, {transform_indices = @transform_14, window_bounds = array<i64: 1, 3, 256>}, {transform_indices = @transform_15, window_bounds = array<i64: 1, 3, 256>}]} {
    %0 = arith.index_cast %arg0 : i32 to index
    %1 = memref.load %arg2[%0] : memref<4xf32, #tpu.memory_space<smem>>
    %2 = arith.index_cast %arg0 : i32 to index
    %3 = memref.load %arg3[%2] : memref<4xf32, #tpu.memory_space<smem>>
    %4 = arith.index_cast %arg0 : i32 to index
    %5 = memref.load %arg4[%4] : memref<4xf32, #tpu.memory_space<smem>>
    %6 = arith.index_cast %arg0 : i32 to index
    %7 = memref.load %arg5[%6] : memref<4xf32, #tpu.memory_space<smem>>
    %8 = arith.index_cast %arg0 : i32 to index
    %9 = memref.load %arg6[%8] : memref<4xf32, #tpu.memory_space<smem>>
    %c0 = arith.constant 0 : index
    %c0_0 = arith.constant 0 : index
    %c0_1 = arith.constant 0 : index
    %10 = vector.load %arg7[%c0, %c0_0, %c0_1] : memref<1x3x256xf32, #tpu.memory_space<vmem>>, vector<1x3x256xf32>
    %11 = vector.shape_cast %10 : vector<1x3x256xf32> to vector<3x256xf32>
    %c0_2 = arith.constant 0 : index
    %c0_3 = arith.constant 0 : index
    %c0_4 = arith.constant 0 : index
    %12 = vector.load %arg8[%c0_2, %c0_3, %c0_4] : memref<1x3x256xf32, #tpu.memory_space<vmem>>, vector<1x3x256xf32>
    %13 = vector.shape_cast %12 : vector<1x3x256xf32> to vector<3x256xf32>
    %14 = vector.broadcast %1 : f32 to vector<3x256xf32>
    %15 = arith.mulf %14, %13 : vector<3x256xf32>
    %16 = arith.addf %11, %15 : vector<3x256xf32>
    %c0_5 = arith.constant 0 : index
    %c0_6 = arith.constant 0 : index
    %c0_7 = arith.constant 0 : index
    %17 = vector.load %arg17[%c0_5, %c0_6, %c0_7] : memref<1x3x256xf32, #tpu.memory_space<vmem>>, vector<1x3x256xf32>
    %18 = vector.shape_cast %17 : vector<1x3x256xf32> to vector<3x256xf32>
    %19 = vector.shape_cast %16 : vector<3x256xf32> to vector<1x3x256xf32>
    tpu.vector_store %arg17[%c0_5, %c0_6, %c0_7], %19 {strides = array<i32>} : memref<1x3x256xf32, #tpu.memory_space<vmem>>, vector<1x3x256xf32>,
    %c0_8 = arith.constant 0 : index
    %c0_9 = arith.constant 0 : index
    %c0_10 = arith.constant 0 : index
    %20 = vector.load %arg9[%c0_8, %c0_9, %c0_10] : memref<1x13x256xf32, #tpu.memory_space<vmem>>, vector<1x13x256xf32>
    %21 = vector.shape_cast %20 : vector<1x13x256xf32> to vector<13x256xf32>
    %22 = vector.broadcast %3 : f32 to vector<3x256xf32>
    %23 = arith.mulf %16, %22 : vector<3x256xf32>
    %24 = vector.broadcast %3 : f32 to vector<13x256xf32>
    %25 = arith.mulf %21, %24 : vector<13x256xf32>
    %c0_11 = arith.constant 0 : index
    %c0_12 = arith.constant 0 : index
    %26 = vector.load %arg10[%c0_11, %c0_12] : memref<32x3xf32, #tpu.memory_space<vmem>>, vector<32x3xf32>
    %cst = arith.constant dense<0.000000e+00> : vector<32x256xf32>
    %27 = tpu.matmul %26, %23, %cst {dimension_numbers = #tpu.dot_dimension_numbers<[1], [0], [0], [1], [0, 0, 1, 1], [], []>} : vector<32x3xf32>, vector<3x256xf32>, vector<32x256xf32> -> vector<32x256xf32>
    %c0_13 = arith.constant 0 : index
    %c0_14 = arith.constant 0 : index
    %28 = vector.load %arg11[%c0_13, %c0_14] : memref<32x13xf32, #tpu.memory_space<vmem>>, vector<32x13xf32>
    %cst_15 = arith.constant dense<0.000000e+00> : vector<32x256xf32>
    %29 = tpu.matmul %28, %25, %cst_15 {dimension_numbers = #tpu.dot_dimension_numbers<[1], [0], [0], [1], [0, 0, 1, 1], [], []>} : vector<32x13xf32>, vector<13x256xf32>, vector<32x256xf32> -> vector<32x256xf32>
    %30 = arith.addf %27, %29 : vector<32x256xf32>
    %c0_16 = arith.constant 0 : index
    %c0_17 = arith.constant 0 : index
    %31 = vector.load %arg13[%c0_16, %c0_17] : memref<32x1xf32, #tpu.memory_space<vmem>>, vector<32x1xf32>
    %c0_18 = arith.constant 0 : index
    %c0_19 = arith.constant 0 : index
    %32 = vector.load %arg12[%c0_18, %c0_19] : memref<32x1xf32, #tpu.memory_space<vmem>>, vector<32x1xf32>
    %33 = vector.broadcast %9 : f32 to vector<32x1xf32>
    %34 = arith.mulf %33, %32 : vector<32x1xf32>
    %35 = arith.addf %31, %34 : vector<32x1xf32>
    %36 = vector.broadcast %35 : vector<32x1xf32> to vector<32x256xf32>
    %37 = arith.addf %30, %36 : vector<32x256xf32>
    %cst_20 = arith.constant 0.000000e+00 : f32
    %38 = vector.broadcast %cst_20 : f32 to vector<32x256xf32>
    %39 = arith.maximumf %37, %38 : vector<32x256xf32>
    %c0_21 = arith.constant 0 : index
    %c0_22 = arith.constant 0 : index
    %40 = vector.load %arg14[%c0_21, %c0_22] : memref<3x32xf32, #tpu.memory_space<vmem>>, vector<3x32xf32>
    %cst_23 = arith.constant dense<0.000000e+00> : vector<3x256xf32>
    %41 = tpu.matmul %40, %39, %cst_23 {dimension_numbers = #tpu.dot_dimension_numbers<[1], [0], [0], [1], [0, 0, 1, 1], [], []>} : vector<3x32xf32>, vector<32x256xf32>, vector<3x256xf32> -> vector<3x256xf32>
    %c0_24 = arith.constant 0 : index
    %c0_25 = arith.constant 0 : index
    %42 = vector.load %arg15[%c0_24, %c0_25] : memref<3x1xf32, #tpu.memory_space<vmem>>, vector<3x1xf32>
    %43 = vector.broadcast %42 : vector<3x1xf32> to vector<3x256xf32>
    %44 = arith.addf %41, %43 : vector<3x256xf32>
    %45 = vector.broadcast %5 : f32 to vector<3x256xf32>
    %46 = arith.mulf %45, %16 : vector<3x256xf32>
    %47 = vector.broadcast %7 : f32 to vector<3x256xf32>
    %48 = arith.mulf %47, %44 : vector<3x256xf32>
    %49 = arith.addf %46, %48 : vector<3x256xf32>
    %c0_26 = arith.constant 0 : index
    %c0_27 = arith.constant 0 : index
    %c0_28 = arith.constant 0 : index
    %50 = vector.load %arg16[%c0_26, %c0_27, %c0_28] : memref<1x3x256xf32, #tpu.memory_space<vmem>>, vector<1x3x256xf32>
    %51 = vector.shape_cast %50 : vector<1x3x256xf32> to vector<3x256xf32>
    %52 = vector.shape_cast %49 : vector<3x256xf32> to vector<1x3x256xf32>
    tpu.vector_store %arg16[%c0_26, %c0_27, %c0_28], %52 {strides = array<i32>} : memref<1x3x256xf32, #tpu.memory_space<vmem>>, vector<1x3x256xf32>,
    return
  }
  func.func @transform_0(%arg0: i32, %arg1: i32) -> i32 {
    %c0_i32 = arith.constant 0 : i32
    %c0_i32_0 = arith.constant 0 : i32
    return %c0_i32 : i32
  }
  func.func @transform_1(%arg0: i32, %arg1: i32) -> i32 {
    %c0_i32 = arith.constant 0 : i32
    %c0_i32_0 = arith.constant 0 : i32
    return %c0_i32 : i32
  }
  func.func @transform_2(%arg0: i32, %arg1: i32) -> i32 {
    %c0_i32 = arith.constant 0 : i32
    %c0_i32_0 = arith.constant 0 : i32
    return %c0_i32 : i32
  }
  func.func @transform_3(%arg0: i32, %arg1: i32) -> i32 {
    %c0_i32 = arith.constant 0 : i32
    %c0_i32_0 = arith.constant 0 : i32
    return %c0_i32 : i32
  }
  func.func @transform_4(%arg0: i32, %arg1: i32) -> i32 {
    %c0_i32 = arith.constant 0 : i32
    %c0_i32_0 = arith.constant 0 : i32
    return %c0_i32 : i32
  }
  func.func @transform_5(%arg0: i32, %arg1: i32) -> (i32, i32, i32) {
    %c0_i32 = arith.constant 0 : i32
    %c0_i32_0 = arith.constant 0 : i32
    return %arg0, %c0_i32, %arg1 : i32, i32, i32
  }
  func.func @transform_6(%arg0: i32, %arg1: i32) -> (i32, i32, i32) {
    %c0_i32 = arith.constant 0 : i32
    %c0_i32_0 = arith.constant 0 : i32
    return %arg0, %c0_i32, %arg1 : i32, i32, i32
  }
  func.func @transform_7(%arg0: i32, %arg1: i32) -> (i32, i32, i32) {
    %c0_i32 = arith.constant 0 : i32
    %c0_i32_0 = arith.constant 0 : i32
    return %arg0, %c0_i32, %arg1 : i32, i32, i32
  }
  func.func @transform_8(%arg0: i32, %arg1: i32) -> (i32, i32) {
    %c0_i32 = arith.constant 0 : i32
    %c0_i32_0 = arith.constant 0 : i32
    %c0_i32_1 = arith.constant 0 : i32
    return %c0_i32, %c0_i32_0 : i32, i32
  }
  func.func @transform_9(%arg0: i32, %arg1: i32) -> (i32, i32) {
    %c0_i32 = arith.constant 0 : i32
    %c0_i32_0 = arith.constant 0 : i32
    %c0_i32_1 = arith.constant 0 : i32
    return %c0_i32, %c0_i32_0 : i32, i32
  }
  func.func @transform_10(%arg0: i32, %arg1: i32) -> (i32, i32) {
    %c0_i32 = arith.constant 0 : i32
    %c0_i32_0 = arith.constant 0 : i32
    %c0_i32_1 = arith.constant 0 : i32
    return %c0_i32, %c0_i32_0 : i32, i32
  }
  func.func @transform_11(%arg0: i32, %arg1: i32) -> (i32, i32) {
    %c0_i32 = arith.constant 0 : i32
    %c0_i32_0 = arith.constant 0 : i32
    %c0_i32_1 = arith.constant 0 : i32
    return %c0_i32, %c0_i32_0 : i32, i32
  }
  func.func @transform_12(%arg0: i32, %arg1: i32) -> (i32, i32) {
    %c0_i32 = arith.constant 0 : i32
    %c0_i32_0 = arith.constant 0 : i32
    %c0_i32_1 = arith.constant 0 : i32
    return %c0_i32, %c0_i32_0 : i32, i32
  }
  func.func @transform_13(%arg0: i32, %arg1: i32) -> (i32, i32) {
    %c0_i32 = arith.constant 0 : i32
    %c0_i32_0 = arith.constant 0 : i32
    %c0_i32_1 = arith.constant 0 : i32
    return %c0_i32, %c0_i32_0 : i32, i32
  }
  func.func @transform_14(%arg0: i32, %arg1: i32) -> (i32, i32, i32) {
    %c0_i32 = arith.constant 0 : i32
    %c0_i32_0 = arith.constant 0 : i32
    return %arg0, %c0_i32, %arg1 : i32, i32, i32
  }
  func.func @transform_15(%arg0: i32, %arg1: i32) -> (i32, i32, i32) {
    %c0_i32 = arith.constant 0 : i32
    %c0_i32_0 = arith.constant 0 : i32
    return %arg0, %c0_i32, %arg1 : i32, i32, i32
  }
}

</mosaic_0001>

<llo_original>
// kernel: genvs_forward.4
$region0: #{genvs_forward.4}
  #allocation0 [shape = 'u32[]', space=smem, size = 0x4, offset = 0x4, fixed_abs, tag = 'smem constant byte address 0x4 - core index']
  #allocation1 [shape = 'u32[72,128]{1,0:T(1,128)}', space=vmem, size = 0x9000, scoped, tag = 'internal scratch']
  %s0 = inlined_call_operand.vmem [shape: f32[4,3,256], index: 0, kind: input, shape index: {}]
  %s1 = inlined_call_operand.vmem [shape: f32[13,3], index: 1, kind: input, shape index: {}]
  %s2 = inlined_call_operand.vmem [shape: f32[13,1], index: 2, kind: input, shape index: {}]
  %s3 = inlined_call_operand.vmem [shape: f32[4,13,256], index: 3, kind: output, shape index: {}]
  %s4 = sld [smem:[#allocation0]]
  $region45: #{genvs_forward.4} parent=0
    _
  %s6 = ssub.s32 1, %s4
  %s7 = scalar_select 0, %s6, %s4
  loop: start=0, step=1, limit=6
  $region2: #{genvs_forward.4} parent=0 // loop_pre_header
    _
  $region3: #{genvs_forward.4} parent=0 // loop_header
    %s9 = sphi 0, %s13
    %p10 = scmp.ge.s32.totalorder %s9, 6
    %s16 = sphi 0, %s28
    %s17 = sphi 0, %s24
    %s18 = sphi 0, %s16
    %s19 = sphi 0, %s17
    %s20 = sphi 0, %s18
    %s21 = sphi 0, %s19
    %s33 = sphi 0, %s35
    %s36 = sphi 0, %s33
    %s37 = sphi 0, %s36
    %s53 = sphi 0, %s37
    %s57 = sphi 0, %s57
    %s59 = sphi 0, %s57
    %s60 = sphi 0, %s59
    %s74 = sphi 0, %s60
    %s78 = sphi 0, %s78
    %s80 = sphi 0, %s78
    %s81 = sphi 0, %s80
    %s95 = sphi 0, %s81
    %s103 = sphi 0, %s105
    %s106 = sphi 0, %s103
    %s107 = sphi 0, %s106
    %s123 = sphi 0, %s107
  $region4: #{genvs_forward.4} parent=0 // loop_header_branch
    %12 = sbr.rel (%p10) target = $region8
  $region5: #{genvs_forward.4} parent=0 // loop_body
    %s14 = ssub.s32 %s9, 1
    %s15 = ssub.s32 %s9, 2
    %s22 = sadd.s32 1, %s17
    %p23 = scmp.ge.s32.totalorder %s22, 1
    %s24 = scalar_select %p23, 0, %s22
    %s25 = sadd.s32 1, %s16
    %s26 = scalar_select %p23, %s25, %s16
    %p27 = scmp.ge.s32.totalorder %s26, 4
    %s28 = scalar_select %p27, 0, %s26
    %s29 = ssub.s32 %s16, %s28
    %s30 = ssub.s32 %s17, %s24
    %s31 = sor.u32 %s29, %s30
    %p32 = scmp.eq.s32.totalorder %s31, 0
    %s34 = sadd.s32 %s33, 1
    %s35 = scalar_select %p32, %s33, %s34
    %p38 = pneg %p32
    %p39 = scmp.eq.s32.totalorder %s9, 3
    %p40 = por %p38, %p39
    %p41 = scmp.ne.s32.totalorder %s33, %s36
    %p42 = scmp.eq.s32.totalorder %s9, 0
    %p43 = por %p41, %p42
    %p44 = scmp.ne.s32.totalorder %s33, %s36
    %p45 = scmp.eq.s32.totalorder %s14, 3
    %p46 = por %p44, %p45
    %p47 = scmp.ne.s32.totalorder %s36, %s37
    %p48 = scmp.eq.s32.totalorder %s14, 0
    %p49 = por %p47, %p48
    %p50 = scmp.ne.s32.totalorder %s36, %s37
    %p51 = scmp.eq.s32.totalorder %s15, 3
    %p52 = por %p50, %p51
    %p54 = scmp.ne.s32.totalorder %s37, %s53
    %p55 = scmp.eq.s32.totalorder %s15, 0
    %p56 = por %p54, %p55
    %s58 = sadd.s32 %s57, 1
    %p61 = scmp.eq.s32.totalorder %s9, 3
    %p62 = scmp.ne.s32.totalorder %s57, %s59
    %p63 = scmp.eq.s32.totalorder %s9, 0
    %p64 = por %p62, %p63
    %p65 = scmp.ne.s32.totalorder %s57, %s59
    %p66 = scmp.eq.s32.totalorder %s14, 3
    %p67 = por %p65, %p66
    %p68 = scmp.ne.s32.totalorder %s59, %s60
    %p69 = scmp.eq.s32.totalorder %s14, 0
    %p70 = por %p68, %p69
    %p71 = scmp.ne.s32.totalorder %s59, %s60
    %p72 = scmp.eq.s32.totalorder %s15, 3
    %p73 = por %p71, %p72
    %p75 = scmp.ne.s32.totalorder %s60, %s74
    %p76 = scmp.eq.s32.totalorder %s15, 0
    %p77 = por %p75, %p76
    %s79 = sadd.s32 %s78, 1
    %p82 = scmp.eq.s32.totalorder %s9, 3
    %p83 = scmp.ne.s32.totalorder %s78, %s80
    %p84 = scmp.eq.s32.totalorder %s9, 0
    %p85 = por %p83, %p84
    %p86 = scmp.ne.s32.totalorder %s78, %s80
    %p87 = scmp.eq.s32.totalorder %s14, 3
    %p88 = por %p86, %p87
    %p89 = scmp.ne.s32.totalorder %s80, %s81
    %p90 = scmp.eq.s32.totalorder %s14, 0
    %p91 = por %p89, %p90
    %p92 = scmp.ne.s32.totalorder %s80, %s81
    %p93 = scmp.eq.s32.totalorder %s15, 3
    %p94 = por %p92, %p93
    %p96 = scmp.ne.s32.totalorder %s81, %s95
    %p97 = scmp.eq.s32.totalorder %s15, 0
    %p98 = por %p96, %p97
    %s99 = ssub.s32 %s16, %s28
    %s100 = ssub.s32 %s17, %s24
    %s101 = sor.u32 %s99, %s100
    %p102 = scmp.eq.s32.totalorder %s101, 0
    %s104 = sadd.s32 %s103, 1
    %s105 = scalar_select %p102, %s103, %s104
    %p108 = pneg %p102
    %p109 = scmp.eq.s32.totalorder %s9, 3
    %p110 = por %p108, %p109
    %p111 = scmp.ne.s32.totalorder %s103, %s106
    %p112 = scmp.eq.s32.totalorder %s9, 0
    %p113 = por %p111, %p112
    %p114 = scmp.ne.s32.totalorder %s103, %s106
    %p115 = scmp.eq.s32.totalorder %s14, 3
    %p116 = por %p114, %p115
    %p117 = scmp.ne.s32.totalorder %s106, %s107
    %p118 = scmp.eq.s32.totalorder %s14, 0
    %p119 = por %p117, %p118
    %p120 = scmp.ne.s32.totalorder %s106, %s107
    %p121 = scmp.eq.s32.totalorder %s15, 3
    %p122 = por %p120, %p121
    %p124 = scmp.ne.s32.totalorder %s107, %s123
    %p125 = scmp.eq.s32.totalorder %s15, 0
    %p126 = por %p124, %p125
    %p127 = scmp.le.s32.totalorder 1, %s9
    %p128 = scmp.lt.s32.totalorder %s9, 5
    %p129 = pnand %p127, %p128
    %p130 = pneg %p129
    // Predicated region
    $region9: #{genvs_forward.4} parent=5 // pred_check
      _
    $region10: #{genvs_forward.4} parent=5 // pred_check_branch
      %132 = sbr.rel (%p129) target = $region12
    $region11: #{genvs_forward.4} parent=5 // pred_region
      %s133 = ssub.s32 %s9, 1
      // Predicated region
      $region13: #{genvs_forward.4} parent=11 // pred_check
        %p134 = pneg %p70
      $region14: #{genvs_forward.4} parent=11 // pred_check_branch
        %136 = sbr.rel (%p134) target = $region16
      $region15: #{genvs_forward.4} parent=11 // pred_region
        _
      $region16: #{genvs_forward.4} parent=11 // pred_fallthru
        _
      // Predicated region
      $region17: #{genvs_forward.4} parent=11 // pred_check
        %p137 = pneg %p91
      $region18: #{genvs_forward.4} parent=11 // pred_check_branch
        %139 = sbr.rel (%p137) target = $region20
      $region19: #{genvs_forward.4} parent=11 // pred_region
        _
      $region20: #{genvs_forward.4} parent=11 // pred_fallthru
        _
    $region12: #{genvs_forward.4} parent=5 // pred_fallthru
      _
    %p140 = scmp.lt.s32.totalorder %s9, 4
    // Predicated region
    $region21: #{genvs_forward.4} parent=5 // pred_check
      %p141 = pneg %p140
    $region22: #{genvs_forward.4} parent=5 // pred_check_branch
      %143 = sbr.rel (%p141) target = $region24
    $region23: #{genvs_forward.4} parent=5 // pred_region
      // Predicated region
      $region25: #{genvs_forward.4} parent=23 // pred_check
        %p144 = pneg %p43
      $region26: #{genvs_forward.4} parent=23 // pred_check_branch
        %146 = sbr.rel (%p144) target = $region28
      $region27: #{genvs_forward.4} parent=23 // pred_region
        %s147 = smul.u32 2, %s17
        %p148 = scmp.lt.s32.totalorder %s16, 3
        %s149 = scalar_select %p148, %s16, 3
        %p150 = scmp.lt.s32.totalorder %s147, 1
        %s151 = scalar_select %p150, %s147, 1
        %s152 = smul.addr %s149, 2
        %s153 = sadd.s32 %s151, %s152
        %s154 = smul.addr %s153, 4
        %s155 = scalar_lea.vmem %s0, %s154
        %s156 = smul.u32 2, %s17
      $region28: #{genvs_forward.4} parent=23 // pred_fallthru
        _
    $region24: #{genvs_forward.4} parent=5 // pred_fallthru
      _
    %p157 = scmp.le.s32.totalorder 1, %s9
    %p158 = scmp.lt.s32.totalorder %s9, 5
    %p159 = pnand %p157, %p158
    %p160 = pneg %p159
    // Predicated region
    $region29: #{genvs_forward.4} parent=5 // pred_check
      _
    $region30: #{genvs_forward.4} parent=5 // pred_check_branch
      %162 = sbr.rel (%p159) target = $region32
    $region31: #{genvs_forward.4} parent=5 // pred_region
      %s163 = ssub.s32 %s9, 1
      %s164 = smul.u32 2, %s19
      %p165 = scmp.lt.s32.totalorder %s18, 3
      %s166 = scalar_select %p165, %s18, 3
      %p167 = scmp.lt.s32.totalorder %s164, 1
      %s168 = scalar_select %p167, %s164, 1
      %s169 = smul.addr %s166, 2
      %s170 = sadd.s32 %s168, %s169
      %s171 = smul.addr %s170, 4
      %s172 = scalar_lea.vmem %s0, %s171
      %p173 = pneg %p49
      %p174 = pneg %p46
      %p175 = pneg %p70
      %p176 = pneg %p67
      %p177 = pneg %p91
      %p178 = pneg %p88
      %p179 = pneg %p119
      %p180 = pneg %p116
      %s181 = smul.u32 2, %s19
      %p182 = scmp.lt.s32.totalorder %s18, 3
      %s183 = scalar_select %p182, %s18, 3
      %p184 = scmp.lt.s32.totalorder %s181, 1
      %s185 = scalar_select %p184, %s181, 1
      %s186 = smul.addr %s183, 4
      %s187 = sadd.s32 %s185, %s186
      %s188 = smul.addr %s187, 8
      %s189 = scalar_lea.vmem %s3, %s188
      %s190 = smul.u32 2, %s19
      %p191 = scmp.lt.s32.totalorder %s18, 3
      %s192 = scalar_select %p191, %s18, 3
      %p193 = scmp.lt.s32.totalorder %s190, 1
      %s194 = scalar_select %p193, %s190, 1
      %s195 = smul.addr %s192, 2
      %s196 = sadd.s32 %s194, %s195
      %s197 = smul.addr %s196, 4
      %s198 = scalar_lea.vmem %s0, %s197
      %s199 = smul.u32 2, %s19
      %s200 = smul.u32 2, %s19
      %p201 = scmp.lt.s32.totalorder %s18, 3
      %s202 = scalar_select %p201, %s18, 3
      %p203 = scmp.lt.s32.totalorder %s200, 1
      %s204 = scalar_select %p203, %s200, 1
      %s205 = smul.addr %s202, 4
      %s206 = sadd.s32 %s204, %s205
      %s207 = smul.addr %s206, 8
      %s208 = scalar_lea.vmem %s3, %s207
      %s209 = smul.u32 2, %s19
      %v210 = vld [vmem:[%s1] sm:$0xff]
      %v211 = vld [vmem:[%s1 + $0x8] sm:$0x1f]
      %v212 = vld [vmem:[%s198] sm:$0x77]
      %v213 = vld [vmem:[%s2] sm:$0xff]
      %v214 = vld [vmem:[%s2 + $0x8] sm:$0x1f]
      %216 = vset.pattern.permute.xlu0 0
      %217 = vperm.xlu0 %216, %v213
      %v218 = vpop.permute.xlu0 %217
      %221 = vset.pattern.permute.xlu0 0
      %222 = vperm.xlu0 %221, %v214
      %v223 = vpop.permute.xlu0 %222
      %226 = vst [vmem:[#allocation1] ss:$2 sm:$0xff] %v212
      %v227 = vld.sshfl [vmem:[#allocation1] sm:$0xff pattern:$0x75316420]
      %v228 = vld.sshfl [vmem:[#allocation1 + $0x8] sm:$0xff pattern:$0x75316420]
      %vm229 = vcmask 23552
      %v231 = vsel %vm229, %v210, 0
      %v234 = vsel %vm229, %v211, 0
      %vm236 = vcmask 1042432
      %v237 = vsel %vm236, %v227, 0
      %v239 = vsel %vm236, %v228, 0
      %241 = vmatpush.msra.mxu0 0.0
      %242 = vmatpush.msra.mxu0 0.0
      %243 = vmatpush.msra.mxu0 0.0
      %244 = vmatpush.msra.mxu0 0.0
      %245 = vmatpush.msra.mxu0 0.0
      %246 = vmatpush.msra.mxu0 0.0
      %247 = vmatpush.msra.mxu0 0.0
      %248 = vmatpush.msra.mxu0 0.0
      %249 = vmatpush.msra.mxu0 0.0
      %250 = vmatpush.msra.mxu0 0.0
      %251 = vmatpush.msra.mxu0 0.0
      %252 = vmatpush.msra.mxu0 0.0
      %253 = vmatpush.msra.mxu0 0.0
      %254 = vmatpush.msra.mxu0 0.0
      %255 = vmatpush.msra.mxu0 0.0
      %256 = vmatpush.msra.mxu0 %v237
      %257 = vmatmul.f32.gmra.mxu0 %v231
      %v258 = vpop.f32.mrf.mxu0
      %v259 = vadd.f32 %v218, %v258
      %260 = vmatmul.f32.gmra.mxu0 %v234
      %v261 = vpop.f32.mrf.mxu0
      %v262 = vadd.f32 %v223, %v261
      %263 = vdwg.mxu0
      %264 = vmatpush.msra.mxu0 0.0
      %265 = vmatpush.msra.mxu0 0.0
      %266 = vmatpush.msra.mxu0 0.0
      %267 = vmatpush.msra.mxu0 0.0
      %268 = vmatpush.msra.mxu0 0.0
      %269 = vmatpush.msra.mxu0 0.0
      %270 = vmatpush.msra.mxu0 0.0
      %271 = vmatpush.msra.mxu0 0.0
      %272 = vmatpush.msra.mxu0 0.0
      %273 = vmatpush.msra.mxu0 0.0
      %274 = vmatpush.msra.mxu0 0.0
      %275 = vmatpush.msra.mxu0 0.0
      %276 = vmatpush.msra.mxu0 0.0
      %277 = vmatpush.msra.mxu0 0.0
      %278 = vmatpush.msra.mxu0 0.0
      %279 = vmatpush.msra.mxu0 %v239
      %280 = vmatmul.f32.gmra.mxu0 %v231
      %v281 = vpop.f32.mrf.mxu0
      %v282 = vadd.f32 %v218, %v281
      %283 = vmatmul.f32.gmra.mxu0 %v234
      %v284 = vpop.f32.mrf.mxu0
      %v285 = vadd.f32 %v223, %v284
      %286 = vdwg.mxu0
      %v287 = vmax.f32 %v259, 0.0
      %v288 = vmax.f32 %v282, 0.0
      %v289 = vmax.f32 %v262, 0.0
      %v290 = vmax.f32 %v285, 0.0
      %291 = vst [vmem:[%s208] sm:$0xff] %v287
      %292 = vst [vmem:[%s208 + $0x8] sm:$0xff] %v288
      %293 = vst [vmem:[%s208 + $0x10] sm:$0x1f] %v289
      %294 = vst [vmem:[%s208 + $0x18] sm:$0x1f] %v290
      %s295 = smul.u32 2, %s19
      %p296 = scmp.lt.s32.totalorder %s18, 3
      %s297 = scalar_select %p296, %s18, 3
      %p298 = scmp.lt.s32.totalorder %s295, 1
      %s299 = scalar_select %p298, %s295, 1
      %s300 = smul.addr %s297, 4
      %s301 = sadd.s32 %s299, %s300
      %s302 = smul.addr %s301, 8
      %s303 = scalar_lea.vmem %s3, %s302
      // Predicated region
      $region33: #{genvs_forward.4} parent=31 // pred_check
        %p304 = pneg %p116
      $region34: #{genvs_forward.4} parent=31 // pred_check_branch
        %306 = sbr.rel (%p304) target = $region36
      $region35: #{genvs_forward.4} parent=31 // pred_region
        %s307 = smul.u32 2, %s19
      $region36: #{genvs_forward.4} parent=31 // pred_fallthru
        _
    $region32: #{genvs_forward.4} parent=5 // pred_fallthru
      _
    %p308 = scmp.le.s32.totalorder 2, %s9
    // Predicated region
    $region37: #{genvs_forward.4} parent=5 // pred_check
      %p309 = pneg %p308
    $region38: #{genvs_forward.4} parent=5 // pred_check_branch
      %311 = sbr.rel (%p309) target = $region40
    $region39: #{genvs_forward.4} parent=5 // pred_region
      %s312 = ssub.s32 %s9, 2
      // Predicated region
      $region41: #{genvs_forward.4} parent=39 // pred_check
        %p313 = pneg %p122
      $region42: #{genvs_forward.4} parent=39 // pred_check_branch
        %315 = sbr.rel (%p313) target = $region44
      $region43: #{genvs_forward.4} parent=39 // pred_region
        %s316 = smul.u32 2, %s21
        %p317 = scmp.lt.s32.totalorder %s20, 3
        %s318 = scalar_select %p317, %s20, 3
        %p319 = scmp.lt.s32.totalorder %s316, 1
        %s320 = scalar_select %p319, %s316, 1
        %s321 = smul.addr %s318, 4
        %s322 = sadd.s32 %s320, %s321
        %s323 = smul.addr %s322, 8
        %s324 = scalar_lea.vmem %s3, %s323
      $region44: #{genvs_forward.4} parent=39 // pred_fallthru
        _
    $region40: #{genvs_forward.4} parent=5 // pred_fallthru
      _
  $region6: #{genvs_forward.4} parent=0 // loop_footer
    %s13 = sadd.s32 1, %s9
  $region7: #{genvs_forward.4} parent=0 // loop_footer_branch
    %8 = sbr.rel target = $region3
  $region8: #{genvs_forward.4} parent=0 // loop_exit
    _

// kernel: genvs_forward.5
$region0: #{genvs_forward.5}
  #allocation0 [shape = 'u32[]', space=smem, size = 0x4, offset = 0x4, fixed_abs, tag = 'smem constant byte address 0x4 - core index']
  #allocation1 [shape = 'u32[72,128]{1,0:T(1,128)}', space=vmem, size = 0x9000, scoped, tag = 'internal scratch']
  %s0 = inlined_call_operand.vmem [shape: f32[4], index: 0, kind: input, shape index: {}]
  %s1 = inlined_call_operand.vmem [shape: f32[4], index: 1, kind: input, shape index: {}]
  %s2 = inlined_call_operand.vmem [shape: f32[4], index: 2, kind: input, shape index: {}]
  %s3 = inlined_call_operand.vmem [shape: f32[4], index: 3, kind: input, shape index: {}]
  %s4 = inlined_call_operand.vmem [shape: f32[4], index: 4, kind: input, shape index: {}]
  %s5 = inlined_call_operand.vmem [shape: f32[4,3,256], index: 5, kind: input, shape index: {}]
  %s6 = inlined_call_operand.vmem [shape: f32[4,3,256], index: 6, kind: input, shape index: {}]
  %s7 = inlined_call_operand.vmem [shape: f32[4,13,256], index: 7, kind: input, shape index: {}]
  %s8 = inlined_call_operand.vmem [shape: f32[32,3], index: 8, kind: input, shape index: {}]
  %s9 = inlined_call_operand.vmem [shape: f32[32,13], index: 9, kind: input, shape index: {}]
  %s10 = inlined_call_operand.vmem [shape: f32[32,1], index: 10, kind: input, shape index: {}]
  %s11 = inlined_call_operand.vmem [shape: f32[32,1], index: 11, kind: input, shape index: {}]
  %s12 = inlined_call_operand.vmem [shape: f32[3,32], index: 12, kind: input, shape index: {}]
  %s13 = inlined_call_operand.vmem [shape: f32[3,1], index: 13, kind: input, shape index: {}]
  %s14 = inlined_call_operand.vmem [shape: f32[4,3,256], index: 14, kind: output, shape index: {0}]
  %s15 = inlined_call_operand.vmem [shape: f32[4,3,256], index: 15, kind: output, shape index: {1}]
  %16 = xla_tuple %s14, %s15
  %s17 = sld [smem:[#allocation0]]
  $region117: #{genvs_forward.5} parent=0
    _
  %s19 = ssub.s32 1, %s17
  %s20 = scalar_select 0, %s19, %s17
  $region1: #{genvs_forward.5} parent=0
    #allocation2 [shape = 'u8[512]{0}', space=smem, size = 0x200, scoped, tag = 'input window, operand 0, single buffered']
    #allocation3 [shape = 's32[2]{0}', space=sflag, size = 0x8, scoped, tag = 'scoped memory for genvs_forward.5']
    #allocation4 [shape = 'u8[512]{0}', space=smem, size = 0x200, scoped, tag = 'input window, operand 1, single buffered']
    #allocation5 [shape = 's32[1]{0}', space=sflag, size = 0x4, scoped, tag = 'scoped memory for genvs_forward.5']
    #allocation6 [shape = 'u8[512]{0}', space=smem, size = 0x200, scoped, tag = 'input window, operand 2, single buffered']
    #allocation7 [shape = 'u8[512]{0}', space=smem, size = 0x200, scoped, tag = 'input window, operand 3, single buffered']
    #allocation8 [shape = 's32[1]{0}', space=sflag, size = 0x4, scoped, tag = 'scoped memory for genvs_forward.5']
    #allocation9 [shape = 'u8[512]{0}', space=smem, size = 0x200, scoped, tag = 'input window, operand 4, single buffered']
    %21 = vsyncpa [#allocation3], 0
    %22 = vsyncpa [#allocation5], 0
    %23 = vsyncpa [#allocation8], 0
    loop: start=0, step=1, limit=6
    $region2: #{genvs_forward.5} parent=1 // loop_pre_header
      _
    $region3: #{genvs_forward.5} parent=1 // loop_header
      %s25 = sphi 0, %s29
      %p26 = scmp.ge.s32.totalorder %s25, 6
      %s32 = sphi 0, %s44
      %s33 = sphi 0, %s40
      %s34 = sphi 0, %s32
      %s35 = sphi 0, %s33
      %s36 = sphi 0, %s34
      %s37 = sphi 0, %s35
      %s45 = sphi 0, %s45
      %s47 = sphi 0, %s45
      %s48 = sphi 0, %s47
      %s62 = sphi 0, %s48
      %s66 = sphi 0, %s66
      %s68 = sphi 0, %s66
      %s69 = sphi 0, %s68
      %s83 = sphi 0, %s69
      %s87 = sphi 0, %s87
      %s89 = sphi 0, %s87
      %s90 = sphi 0, %s89
      %s104 = sphi 0, %s90
      %s108 = sphi 0, %s108
      %s110 = sphi 0, %s108
      %s111 = sphi 0, %s110
      %s125 = sphi 0, %s111
      %s129 = sphi 0, %s129
      %s131 = sphi 0, %s129
      %s132 = sphi 0, %s131
      %s146 = sphi 0, %s132
      %s154 = sphi 0, %s156
      %s157 = sphi 0, %s154
      %s158 = sphi 0, %s157
      %s174 = sphi 0, %s158
      %s182 = sphi 0, %s184
      %s185 = sphi 0, %s182
      %s186 = sphi 0, %s185
      %s202 = sphi 0, %s186
      %s210 = sphi 0, %s212
      %s213 = sphi 0, %s210
      %s214 = sphi 0, %s213
      %s230 = sphi 0, %s214
      %s234 = sphi 0, %s234
      %s236 = sphi 0, %s234
      %s237 = sphi 0, %s236
      %s251 = sphi 0, %s237
      %s255 = sphi 0, %s255
      %s257 = sphi 0, %s255
      %s258 = sphi 0, %s257
      %s272 = sphi 0, %s258
      %s276 = sphi 0, %s276
      %s278 = sphi 0, %s276
      %s279 = sphi 0, %s278
      %s293 = sphi 0, %s279
      %s297 = sphi 0, %s297
      %s299 = sphi 0, %s297
      %s300 = sphi 0, %s299
      %s314 = sphi 0, %s300
      %s318 = sphi 0, %s318
      %s320 = sphi 0, %s318
      %s321 = sphi 0, %s320
      %s335 = sphi 0, %s321
      %s339 = sphi 0, %s339
      %s341 = sphi 0, %s339
      %s342 = sphi 0, %s341
      %s356 = sphi 0, %s342
      %s364 = sphi 0, %s366
      %s367 = sphi 0, %s364
      %s368 = sphi 0, %s367
      %s384 = sphi 0, %s368
      %s392 = sphi 0, %s394
      %s395 = sphi 0, %s392
      %s396 = sphi 0, %s395
      %s412 = sphi 0, %s396
    $region4: #{genvs_forward.5} parent=1 // loop_header_branch
      %28 = sbr.rel (%p26) target = $region8
    $region5: #{genvs_forward.5} parent=1 // loop_body
      %s30 = ssub.s32 %s25, 1
      %s31 = ssub.s32 %s25, 2
      %s38 = sadd.s32 1, %s33
      %p39 = scmp.ge.s32.totalorder %s38, 1
      %s40 = scalar_select %p39, 0, %s38
      %s41 = sadd.s32 1, %s32
      %s42 = scalar_select %p39, %s41, %s32
      %p43 = scmp.ge.s32.totalorder %s42, 4
      %s44 = scalar_select %p43, 0, %s42
      %s46 = sadd.s32 %s45, 1
      %p49 = scmp.eq.s32.totalorder %s25, 3
      %p50 = scmp.ne.s32.totalorder %s45, %s47
      %p51 = scmp.eq.s32.totalorder %s25, 0
      %p52 = por %p50, %p51
      %p53 = scmp.ne.s32.totalorder %s45, %s47
      %p54 = scmp.eq.s32.totalorder %s30, 3
      %p55 = por %p53, %p54
      %p56 = scmp.ne.s32.totalorder %s47, %s48
      %p57 = scmp.eq.s32.totalorder %s30, 0
      %p58 = por %p56, %p57
      %p59 = scmp.ne.s32.totalorder %s47, %s48
      %p60 = scmp.eq.s32.totalorder %s31, 3
      %p61 = por %p59, %p60
      %p63 = scmp.ne.s32.totalorder %s48, %s62
      %p64 = scmp.eq.s32.totalorder %s31, 0
      %p65 = por %p63, %p64
      %s67 = sadd.s32 %s66, 1
      %p70 = scmp.eq.s32.totalorder %s25, 3
      %p71 = scmp.ne.s32.totalorder %s66, %s68
      %p72 = scmp.eq.s32.totalorder %s25, 0
      %p73 = por %p71, %p72
      %p74 = scmp.ne.s32.totalorder %s66, %s68
      %p75 = scmp.eq.s32.totalorder %s30, 3
      %p76 = por %p74, %p75
      %p77 = scmp.ne.s32.totalorder %s68, %s69
      %p78 = scmp.eq.s32.totalorder %s30, 0
      %p79 = por %p77, %p78
      %p80 = scmp.ne.s32.totalorder %s68, %s69
      %p81 = scmp.eq.s32.totalorder %s31, 3
      %p82 = por %p80, %p81
      %p84 = scmp.ne.s32.totalorder %s69, %s83
      %p85 = scmp.eq.s32.totalorder %s31, 0
      %p86 = por %p84, %p85
      %s88 = sadd.s32 %s87, 1
      %p91 = scmp.eq.s32.totalorder %s25, 3
      %p92 = scmp.ne.s32.totalorder %s87, %s89
      %p93 = scmp.eq.s32.totalorder %s25, 0
      %p94 = por %p92, %p93
      %p95 = scmp.ne.s32.totalorder %s87, %s89
      %p96 = scmp.eq.s32.totalorder %s30, 3
      %p97 = por %p95, %p96
      %p98 = scmp.ne.s32.totalorder %s89, %s90
      %p99 = scmp.eq.s32.totalorder %s30, 0
      %p100 = por %p98, %p99
      %p101 = scmp.ne.s32.totalorder %s89, %s90
      %p102 = scmp.eq.s32.totalorder %s31, 3
      %p103 = por %p101, %p102
      %p105 = scmp.ne.s32.totalorder %s90, %s104
      %p106 = scmp.eq.s32.totalorder %s31, 0
      %p107 = por %p105, %p106
      %s109 = sadd.s32 %s108, 1
      %p112 = scmp.eq.s32.totalorder %s25, 3
      %p113 = scmp.ne.s32.totalorder %s108, %s110
      %p114 = scmp.eq.s32.totalorder %s25, 0
      %p115 = por %p113, %p114
      %p116 = scmp.ne.s32.totalorder %s108, %s110
      %p117 = scmp.eq.s32.totalorder %s30, 3
      %p118 = por %p116, %p117
      %p119 = scmp.ne.s32.totalorder %s110, %s111
      %p120 = scmp.eq.s32.totalorder %s30, 0
      %p121 = por %p119, %p120
      %p122 = scmp.ne.s32.totalorder %s110, %s111
      %p123 = scmp.eq.s32.totalorder %s31, 3
      %p124 = por %p122, %p123
      %p126 = scmp.ne.s32.totalorder %s111, %s125
      %p127 = scmp.eq.s32.totalorder %s31, 0
      %p128 = por %p126, %p127
      %s130 = sadd.s32 %s129, 1
      %p133 = scmp.eq.s32.totalorder %s25, 3
      %p134 = scmp.ne.s32.totalorder %s129, %s131
      %p135 = scmp.eq.s32.totalorder %s25, 0
      %p136 = por %p134, %p135
      %p137 = scmp.ne.s32.totalorder %s129, %s131
      %p138 = scmp.eq.s32.totalorder %s30, 3
      %p139 = por %p137, %p138
      %p140 = scmp.ne.s32.totalorder %s131, %s132
      %p141 = scmp.eq.s32.totalorder %s30, 0
      %p142 = por %p140, %p141
      %p143 = scmp.ne.s32.totalorder %s131, %s132
      %p144 = scmp.eq.s32.totalorder %s31, 3
      %p145 = por %p143, %p144
      %p147 = scmp.ne.s32.totalorder %s132, %s146
      %p148 = scmp.eq.s32.totalorder %s31, 0
      %p149 = por %p147, %p148
      %s150 = ssub.s32 %s32, %s44
      %s151 = ssub.s32 %s33, %s40
      %s152 = sor.u32 %s150, %s151
      %p153 = scmp.eq.s32.totalorder %s152, 0
      %s155 = sadd.s32 %s154, 1
      %s156 = scalar_select %p153, %s154, %s155
      %p159 = pneg %p153
      %p160 = scmp.eq.s32.totalorder %s25, 3
      %p161 = por %p159, %p160
      %p162 = scmp.ne.s32.totalorder %s154, %s157
      %p163 = scmp.eq.s32.totalorder %s25, 0
      %p164 = por %p162, %p163
      %p165 = scmp.ne.s32.totalorder %s154, %s157
      %p166 = scmp.eq.s32.totalorder %s30, 3
      %p167 = por %p165, %p166
      %p168 = scmp.ne.s32.totalorder %s157, %s158
      %p169 = scmp.eq.s32.totalorder %s30, 0
      %p170 = por %p168, %p169
      %p171 = scmp.ne.s32.totalorder %s157, %s158
      %p172 = scmp.eq.s32.totalorder %s31, 3
      %p173 = por %p171, %p172
      %p175 = scmp.ne.s32.totalorder %s158, %s174
      %p176 = scmp.eq.s32.totalorder %s31, 0
      %p177 = por %p175, %p176
      %s178 = ssub.s32 %s32, %s44
      %s179 = ssub.s32 %s33, %s40
      %s180 = sor.u32 %s178, %s179
      %p181 = scmp.eq.s32.totalorder %s180, 0
      %s183 = sadd.s32 %s182, 1
      %s184 = scalar_select %p181, %s182, %s183
      %p187 = pneg %p181
      %p188 = scmp.eq.s32.totalorder %s25, 3
      %p189 = por %p187, %p188
      %p190 = scmp.ne.s32.totalorder %s182, %s185
      %p191 = scmp.eq.s32.totalorder %s25, 0
      %p192 = por %p190, %p191
      %p193 = scmp.ne.s32.totalorder %s182, %s185
      %p194 = scmp.eq.s32.totalorder %s30, 3
      %p195 = por %p193, %p194
      %p196 = scmp.ne.s32.totalorder %s185, %s186
      %p197 = scmp.eq.s32.totalorder %s30, 0
      %p198 = por %p196, %p197
      %p199 = scmp.ne.s32.totalorder %s185, %s186
      %p200 = scmp.eq.s32.totalorder %s31, 3
      %p201 = por %p199, %p200
      %p203 = scmp.ne.s32.totalorder %s186, %s202
      %p204 = scmp.eq.s32.totalorder %s31, 0
      %p205 = por %p203, %p204
      %s206 = ssub.s32 %s32, %s44
      %s207 = ssub.s32 %s33, %s40
      %s208 = sor.u32 %s206, %s207
      %p209 = scmp.eq.s32.totalorder %s208, 0
      %s211 = sadd.s32 %s210, 1
      %s212 = scalar_select %p209, %s210, %s211
      %p215 = pneg %p209
      %p216 = scmp.eq.s32.totalorder %s25, 3
      %p217 = por %p215, %p216
      %p218 = scmp.ne.s32.totalorder %s210, %s213
      %p219 = scmp.eq.s32.totalorder %s25, 0
      %p220 = por %p218, %p219
      %p221 = scmp.ne.s32.totalorder %s210, %s213
      %p222 = scmp.eq.s32.totalorder %s30, 3
      %p223 = por %p221, %p222
      %p224 = scmp.ne.s32.totalorder %s213, %s214
      %p225 = scmp.eq.s32.totalorder %s30, 0
      %p226 = por %p224, %p225
      %p227 = scmp.ne.s32.totalorder %s213, %s214
      %p228 = scmp.eq.s32.totalorder %s31, 3
      %p229 = por %p227, %p228
      %p231 = scmp.ne.s32.totalorder %s214, %s230
      %p232 = scmp.eq.s32.totalorder %s31, 0
      %p233 = por %p231, %p232
      %s235 = sadd.s32 %s234, 1
      %p238 = scmp.eq.s32.totalorder %s25, 3
      %p239 = scmp.ne.s32.totalorder %s234, %s236
      %p240 = scmp.eq.s32.totalorder %s25, 0
      %p241 = por %p239, %p240
      %p242 = scmp.ne.s32.totalorder %s234, %s236
      %p243 = scmp.eq.s32.totalorder %s30, 3
      %p244 = por %p242, %p243
      %p245 = scmp.ne.s32.totalorder %s236, %s237
      %p246 = scmp.eq.s32.totalorder %s30, 0
      %p247 = por %p245, %p246
      %p248 = scmp.ne.s32.totalorder %s236, %s237
      %p249 = scmp.eq.s32.totalorder %s31, 3
      %p250 = por %p248, %p249
      %p252 = scmp.ne.s32.totalorder %s237, %s251
      %p253 = scmp.eq.s32.totalorder %s31, 0
      %p254 = por %p252, %p253
      %s256 = sadd.s32 %s255, 1
      %p259 = scmp.eq.s32.totalorder %s25, 3
      %p260 = scmp.ne.s32.totalorder %s255, %s257
      %p261 = scmp.eq.s32.totalorder %s25, 0
      %p262 = por %p260, %p261
      %p263 = scmp.ne.s32.totalorder %s255, %s257
      %p264 = scmp.eq.s32.totalorder %s30, 3
      %p265 = por %p263, %p264
      %p266 = scmp.ne.s32.totalorder %s257, %s258
      %p267 = scmp.eq.s32.totalorder %s30, 0
      %p268 = por %p266, %p267
      %p269 = scmp.ne.s32.totalorder %s257, %s258
      %p270 = scmp.eq.s32.totalorder %s31, 3
      %p271 = por %p269, %p270
      %p273 = scmp.ne.s32.totalorder %s258, %s272
      %p274 = scmp.eq.s32.totalorder %s31, 0
      %p275 = por %p273, %p274
      %s277 = sadd.s32 %s276, 1
      %p280 = scmp.eq.s32.totalorder %s25, 3
      %p281 = scmp.ne.s32.totalorder %s276, %s278
      %p282 = scmp.eq.s32.totalorder %s25, 0
      %p283 = por %p281, %p282
      %p284 = scmp.ne.s32.totalorder %s276, %s278
      %p285 = scmp.eq.s32.totalorder %s30, 3
      %p286 = por %p284, %p285
      %p287 = scmp.ne.s32.totalorder %s278, %s279
      %p288 = scmp.eq.s32.totalorder %s30, 0
      %p289 = por %p287, %p288
      %p290 = scmp.ne.s32.totalorder %s278, %s279
      %p291 = scmp.eq.s32.totalorder %s31, 3
      %p292 = por %p290, %p291
      %p294 = scmp.ne.s32.totalorder %s279, %s293
      %p295 = scmp.eq.s32.totalorder %s31, 0
      %p296 = por %p294, %p295
      %s298 = sadd.s32 %s297, 1
      %p301 = scmp.eq.s32.totalorder %s25, 3
      %p302 = scmp.ne.s32.totalorder %s297, %s299
      %p303 = scmp.eq.s32.totalorder %s25, 0
      %p304 = por %p302, %p303
      %p305 = scmp.ne.s32.totalorder %s297, %s299
      %p306 = scmp.eq.s32.totalorder %s30, 3
      %p307 = por %p305, %p306
      %p308 = scmp.ne.s32.totalorder %s299, %s300
      %p309 = scmp.eq.s32.totalorder %s30, 0
      %p310 = por %p308, %p309
      %p311 = scmp.ne.s32.totalorder %s299, %s300
      %p312 = scmp.eq.s32.totalorder %s31, 3
      %p313 = por %p311, %p312
      %p315 = scmp.ne.s32.totalorder %s300, %s314
      %p316 = scmp.eq.s32.totalorder %s31, 0
      %p317 = por %p315, %p316
      %s319 = sadd.s32 %s318, 1
      %p322 = scmp.eq.s32.totalorder %s25, 3
      %p323 = scmp.ne.s32.totalorder %s318, %s320
      %p324 = scmp.eq.s32.totalorder %s25, 0
      %p325 = por %p323, %p324
      %p326 = scmp.ne.s32.totalorder %s318, %s320
      %p327 = scmp.eq.s32.totalorder %s30, 3
      %p328 = por %p326, %p327
      %p329 = scmp.ne.s32.totalorder %s320, %s321
      %p330 = scmp.eq.s32.totalorder %s30, 0
      %p331 = por %p329, %p330
      %p332 = scmp.ne.s32.totalorder %s320, %s321
      %p333 = scmp.eq.s32.totalorder %s31, 3
      %p334 = por %p332, %p333
      %p336 = scmp.ne.s32.totalorder %s321, %s335
      %p337 = scmp.eq.s32.totalorder %s31, 0
      %p338 = por %p336, %p337
      %s340 = sadd.s32 %s339, 1
      %p343 = scmp.eq.s32.totalorder %s25, 3
      %p344 = scmp.ne.s32.totalorder %s339, %s341
      %p345 = scmp.eq.s32.totalorder %s25, 0
      %p346 = por %p344, %p345
      %p347 = scmp.ne.s32.totalorder %s339, %s341
      %p348 = scmp.eq.s32.totalorder %s30, 3
      %p349 = por %p347, %p348
      %p350 = scmp.ne.s32.totalorder %s341, %s342
      %p351 = scmp.eq.s32.totalorder %s30, 0
      %p352 = por %p350, %p351
      %p353 = scmp.ne.s32.totalorder %s341, %s342
      %p354 = scmp.eq.s32.totalorder %s31, 3
      %p355 = por %p353, %p354
      %p357 = scmp.ne.s32.totalorder %s342, %s356
      %p358 = scmp.eq.s32.totalorder %s31, 0
      %p359 = por %p357, %p358
      %s360 = ssub.s32 %s32, %s44
      %s361 = ssub.s32 %s33, %s40
      %s362 = sor.u32 %s360, %s361
      %p363 = scmp.eq.s32.totalorder %s362, 0
      %s365 = sadd.s32 %s364, 1
      %s366 = scalar_select %p363, %s364, %s365
      %p369 = pneg %p363
      %p370 = scmp.eq.s32.totalorder %s25, 3
      %p371 = por %p369, %p370
      %p372 = scmp.ne.s32.totalorder %s364, %s367
      %p373 = scmp.eq.s32.totalorder %s25, 0
      %p374 = por %p372, %p373
      %p375 = scmp.ne.s32.totalorder %s364, %s367
      %p376 = scmp.eq.s32.totalorder %s30, 3
      %p377 = por %p375, %p376
      %p378 = scmp.ne.s32.totalorder %s367, %s368
      %p379 = scmp.eq.s32.totalorder %s30, 0
      %p380 = por %p378, %p379
      %p381 = scmp.ne.s32.totalorder %s367, %s368
      %p382 = scmp.eq.s32.totalorder %s31, 3
      %p383 = por %p381, %p382
      %p385 = scmp.ne.s32.totalorder %s368, %s384
      %p386 = scmp.eq.s32.totalorder %s31, 0
      %p387 = por %p385, %p386
      %s388 = ssub.s32 %s32, %s44
      %s389 = ssub.s32 %s33, %s40
      %s390 = sor.u32 %s388, %s389
      %p391 = scmp.eq.s32.totalorder %s390, 0
      %s393 = sadd.s32 %s392, 1
      %s394 = scalar_select %p391, %s392, %s393
      %p397 = pneg %p391
      %p398 = scmp.eq.s32.totalorder %s25, 3
      %p399 = por %p397, %p398
      %p400 = scmp.ne.s32.totalorder %s392, %s395
      %p401 = scmp.eq.s32.totalorder %s25, 0
      %p402 = por %p400, %p401
      %p403 = scmp.ne.s32.totalorder %s392, %s395
      %p404 = scmp.eq.s32.totalorder %s30, 3
      %p405 = por %p403, %p404
      %p406 = scmp.ne.s32.totalorder %s395, %s396
      %p407 = scmp.eq.s32.totalorder %s30, 0
      %p408 = por %p406, %p407
      %p409 = scmp.ne.s32.totalorder %s395, %s396
      %p410 = scmp.eq.s32.totalorder %s31, 3
      %p411 = por %p409, %p410
      %p413 = scmp.ne.s32.totalorder %s396, %s412
      %p414 = scmp.eq.s32.totalorder %s31, 0
      %p415 = por %p413, %p414
      %p416 = scmp.le.s32.totalorder 1, %s25
      %p417 = scmp.lt.s32.totalorder %s25, 5
      %p418 = pnand %p416, %p417
      %p419 = pneg %p418
      // Predicated region
      $region9: #{genvs_forward.5} parent=5 // pred_check
        _
      $region10: #{genvs_forward.5} parent=5 // pred_check_branch
        %421 = sbr.rel (%p418) target = $region12
      $region11: #{genvs_forward.5} parent=5 // pred_region
        %s422 = ssub.s32 %s25, 1
        // Predicated region
        $region13: #{genvs_forward.5} parent=11 // pred_check
          %p423 = pneg %p58
        $region14: #{genvs_forward.5} parent=11 // pred_check_branch
          %425 = sbr.rel (%p423) target = $region16
        $region15: #{genvs_forward.5} parent=11 // pred_region
          %427 = vsyncadd [#allocation3], 0
          %s429 = sshll.u32 %s0, 4
          %s430 = int_to_ptr.vmem [resolvable:$true] %s429
          %432 = dma.vmem_to_smem %s430, 16, [#allocation2], [#allocation3]
        $region16: #{genvs_forward.5} parent=11 // pred_fallthru
          _
        // Predicated region
        $region17: #{genvs_forward.5} parent=11 // pred_check
          %p433 = pneg %p79
        $region18: #{genvs_forward.5} parent=11 // pred_check_branch
          %435 = sbr.rel (%p433) target = $region20
        $region19: #{genvs_forward.5} parent=11 // pred_region
          %437 = vsyncadd [#allocation5], 0
          %s439 = sshll.u32 %s1, 4
          %s440 = int_to_ptr.vmem [resolvable:$true] %s439
          %442 = dma.vmem_to_smem %s440, 16, [#allocation4], [#allocation5]
        $region20: #{genvs_forward.5} parent=11 // pred_fallthru
          _
        // Predicated region
        $region21: #{genvs_forward.5} parent=11 // pred_check
          %p443 = pneg %p100
        $region22: #{genvs_forward.5} parent=11 // pred_check_branch
          %445 = sbr.rel (%p443) target = $region24
        $region23: #{genvs_forward.5} parent=11 // pred_region
          %447 = vsyncadd [#allocation5], 0
          %s449 = sshll.u32 %s2, 4
          %s450 = int_to_ptr.vmem [resolvable:$true] %s449
          %452 = dma.vmem_to_smem %s450, 16, [#allocation6], [#allocation5]
        $region24: #{genvs_forward.5} parent=11 // pred_fallthru
          _
        // Predicated region
        $region25: #{genvs_forward.5} parent=11 // pred_check
          %p453 = pneg %p121
        $region26: #{genvs_forward.5} parent=11 // pred_check_branch
          %455 = sbr.rel (%p453) target = $region28
        $region27: #{genvs_forward.5} parent=11 // pred_region
          %457 = vsyncadd [#allocation8], 0
          %s459 = sshll.u32 %s3, 4
          %s460 = int_to_ptr.vmem [resolvable:$true] %s459
          %462 = dma.vmem_to_smem %s460, 16, [#allocation7], [#allocation8]
        $region28: #{genvs_forward.5} parent=11 // pred_fallthru
          _
        // Predicated region
        $region29: #{genvs_forward.5} parent=11 // pred_check
          %p463 = pneg %p142
        $region30: #{genvs_forward.5} parent=11 // pred_check_branch
          %465 = sbr.rel (%p463) target = $region32
        $region31: #{genvs_forward.5} parent=11 // pred_region
          %467 = vsyncadd [#allocation8], 0
          %s469 = sshll.u32 %s4, 4
          %s470 = int_to_ptr.vmem [resolvable:$true] %s469
          %472 = dma.vmem_to_smem %s470, 16, [#allocation9], [#allocation8]
        $region32: #{genvs_forward.5} parent=11 // pred_fallthru
          _
        // Predicated region
        $region33: #{genvs_forward.5} parent=11 // pred_check
          %p473 = pneg %p247
        $region34: #{genvs_forward.5} parent=11 // pred_check_branch
          %475 = sbr.rel (%p473) target = $region36
        $region35: #{genvs_forward.5} parent=11 // pred_region
          _
        $region36: #{genvs_forward.5} parent=11 // pred_fallthru
          _
        // Predicated region
        $region37: #{genvs_forward.5} parent=11 // pred_check
          %p476 = pneg %p268
        $region38: #{genvs_forward.5} parent=11 // pred_check_branch
          %478 = sbr.rel (%p476) target = $region40
        $region39: #{genvs_forward.5} parent=11 // pred_region
          _
        $region40: #{genvs_forward.5} parent=11 // pred_fallthru
          _
        // Predicated region
        $region41: #{genvs_forward.5} parent=11 // pred_check
          %p479 = pneg %p289
        $region42: #{genvs_forward.5} parent=11 // pred_check_branch
          %481 = sbr.rel (%p479) target = $region44
        $region43: #{genvs_forward.5} parent=11 // pred_region
          _
        $region44: #{genvs_forward.5} parent=11 // pred_fallthru
          _
        // Predicated region
        $region45: #{genvs_forward.5} parent=11 // pred_check
          %p482 = pneg %p310
        $region46: #{genvs_forward.5} parent=11 // pred_check_branch
          %484 = sbr.rel (%p482) target = $region48
        $region47: #{genvs_forward.5} parent=11 // pred_region
          _
        $region48: #{genvs_forward.5} parent=11 // pred_fallthru
          _
        // Predicated region
        $region49: #{genvs_forward.5} parent=11 // pred_check
          %p485 = pneg %p331
        $region50: #{genvs_forward.5} parent=11 // pred_check_branch
          %487 = sbr.rel (%p485) target = $region52
        $region51: #{genvs_forward.5} parent=11 // pred_region
          _
        $region52: #{genvs_forward.5} parent=11 // pred_fallthru
          _
        // Predicated region
        $region53: #{genvs_forward.5} parent=11 // pred_check
          %p488 = pneg %p352
        $region54: #{genvs_forward.5} parent=11 // pred_check_branch
          %490 = sbr.rel (%p488) target = $region56
        $region55: #{genvs_forward.5} parent=11 // pred_region
          _
        $region56: #{genvs_forward.5} parent=11 // pred_fallthru
          _
      $region12: #{genvs_forward.5} parent=5 // pred_fallthru
        _
      %p491 = scmp.lt.s32.totalorder %s25, 4
      // Predicated region
      $region57: #{genvs_forward.5} parent=5 // pred_check
        %p492 = pneg %p491
      $region58: #{genvs_forward.5} parent=5 // pred_check_branch
        %494 = sbr.rel (%p492) target = $region60
      $region59: #{genvs_forward.5} parent=5 // pred_region
        // Predicated region
        $region61: #{genvs_forward.5} parent=59 // pred_check
          %p495 = pneg %p164
        $region62: #{genvs_forward.5} parent=59 // pred_check_branch
          %497 = sbr.rel (%p495) target = $region64
        $region63: #{genvs_forward.5} parent=59 // pred_region
          %s498 = smul.u32 2, %s33
          %p499 = scmp.lt.s32.totalorder %s32, 3
          %s500 = scalar_select %p499, %s32, 3
          %p501 = scmp.lt.s32.totalorder %s498, 1
          %s502 = scalar_select %p501, %s498, 1
          %s503 = smul.addr %s500, 2
          %s504 = sadd.s32 %s502, %s503
          %s505 = smul.addr %s504, 4
          %s506 = scalar_lea.vmem %s5, %s505
          %s507 = smul.u32 2, %s33
        $region64: #{genvs_forward.5} parent=59 // pred_fallthru
          _
        // Predicated region
        $region65: #{genvs_forward.5} parent=59 // pred_check
          %p508 = pneg %p192
        $region66: #{genvs_forward.5} parent=59 // pred_check_branch
          %510 = sbr.rel (%p508) target = $region68
        $region67: #{genvs_forward.5} parent=59 // pred_region
          %s511 = smul.u32 2, %s33
          %p512 = scmp.lt.s32.totalorder %s32, 3
          %s513 = scalar_select %p512, %s32, 3
          %p514 = scmp.lt.s32.totalorder %s511, 1
          %s515 = scalar_select %p514, %s511, 1
          %s516 = smul.addr %s513, 2
          %s517 = sadd.s32 %s515, %s516
          %s518 = smul.addr %s517, 4
          %s519 = scalar_lea.vmem %s6, %s518
          %s520 = smul.u32 2, %s33
        $region68: #{genvs_forward.5} parent=59 // pred_fallthru
          _
        // Predicated region
        $region69: #{genvs_forward.5} parent=59 // pred_check
          %p521 = pneg %p220
        $region70: #{genvs_forward.5} parent=59 // pred_check_branch
          %523 = sbr.rel (%p521) target = $region72
        $region71: #{genvs_forward.5} parent=59 // pred_region
          %s524 = smul.u32 2, %s33
          %p525 = scmp.lt.s32.totalorder %s32, 3
          %s526 = scalar_select %p525, %s32, 3
          %p527 = scmp.lt.s32.totalorder %s524, 1
          %s528 = scalar_select %p527, %s524, 1
          %s529 = smul.addr %s526, 4
          %s530 = sadd.s32 %s528, %s529
          %s531 = smul.addr %s530, 8
          %s532 = scalar_lea.vmem %s7, %s531
          %s533 = smul.u32 2, %s33
        $region72: #{genvs_forward.5} parent=59 // pred_fallthru
          _
      $region60: #{genvs_forward.5} parent=5 // pred_fallthru
        _
      %p534 = scmp.le.s32.totalorder 1, %s25
      %p535 = scmp.lt.s32.totalorder %s25, 5
      %p536 = pnand %p534, %p535
      %p537 = pneg %p536
      // Predicated region
      $region73: #{genvs_forward.5} parent=5 // pred_check
        _
      $region74: #{genvs_forward.5} parent=5 // pred_check_branch
        %539 = sbr.rel (%p536) target = $region76
      $region75: #{genvs_forward.5} parent=5 // pred_region
        %s540 = ssub.s32 %s25, 1
        // Predicated region
        $region77: #{genvs_forward.5} parent=75 // pred_check
          %p541 = pneg %p58
        $region78: #{genvs_forward.5} parent=75 // pred_check_branch
          %543 = sbr.rel (%p541) target = $region80
        $region79: #{genvs_forward.5} parent=75 // pred_region
          %545 = dma.done [#allocation3], 16
        $region80: #{genvs_forward.5} parent=75 // pred_fallthru
          _
        // Predicated region
        $region81: #{genvs_forward.5} parent=75 // pred_check
          %p546 = pneg %p79
        $region82: #{genvs_forward.5} parent=75 // pred_check_branch
          %548 = sbr.rel (%p546) target = $region84
        $region83: #{genvs_forward.5} parent=75 // pred_region
          %550 = dma.done [#allocation5], 16
        $region84: #{genvs_forward.5} parent=75 // pred_fallthru
          _
        // Predicated region
        $region85: #{genvs_forward.5} parent=75 // pred_check
          %p551 = pneg %p100
        $region86: #{genvs_forward.5} parent=75 // pred_check_branch
          %553 = sbr.rel (%p551) target = $region88
        $region87: #{genvs_forward.5} parent=75 // pred_region
          %555 = dma.done [#allocation5], 16
        $region88: #{genvs_forward.5} parent=75 // pred_fallthru
          _
        // Predicated region
        $region89: #{genvs_forward.5} parent=75 // pred_check
          %p556 = pneg %p121
        $region90: #{genvs_forward.5} parent=75 // pred_check_branch
          %558 = sbr.rel (%p556) target = $region92
        $region91: #{genvs_forward.5} parent=75 // pred_region
          %560 = dma.done [#allocation8], 16
        $region92: #{genvs_forward.5} parent=75 // pred_fallthru
          _
        // Predicated region
        $region93: #{genvs_forward.5} parent=75 // pred_check
          %p561 = pneg %p142
        $region94: #{genvs_forward.5} parent=75 // pred_check_branch
          %563 = sbr.rel (%p561) target = $region96
        $region95: #{genvs_forward.5} parent=75 // pred_region
          %565 = dma.done [#allocation8], 16
        $region96: #{genvs_forward.5} parent=75 // pred_fallthru
          _
        %566 = sfence
        %p567 = pneg %p58
        %p568 = pneg %p55
        %p569 = pneg %p79
        %p570 = pneg %p76
        %p571 = pneg %p100
        %p572 = pneg %p97
        %p573 = pneg %p121
        %p574 = pneg %p118
        %p575 = pneg %p142
        %p576 = pneg %p139
        %s577 = smul.u32 2, %s35
        %p578 = scmp.lt.s32.totalorder %s34, 3
        %s579 = scalar_select %p578, %s34, 3
        %p580 = scmp.lt.s32.totalorder %s577, 1
        %s581 = scalar_select %p580, %s577, 1
        %s582 = smul.addr %s579, 2
        %s583 = sadd.s32 %s581, %s582
        %s584 = smul.addr %s583, 4
        %s585 = scalar_lea.vmem %s5, %s584
        %p586 = pneg %p170
        %p587 = pneg %p167
        %s588 = smul.u32 2, %s35
        %p589 = scmp.lt.s32.totalorder %s34, 3
        %s590 = scalar_select %p589, %s34, 3
        %p591 = scmp.lt.s32.totalorder %s588, 1
        %s592 = scalar_select %p591, %s588, 1
        %s593 = smul.addr %s590, 2
        %s594 = sadd.s32 %s592, %s593
        %s595 = smul.addr %s594, 4
        %s596 = scalar_lea.vmem %s6, %s595
        %p597 = pneg %p198
        %p598 = pneg %p195
        %s599 = smul.u32 2, %s35
        %p600 = scmp.lt.s32.totalorder %s34, 3
        %s601 = scalar_select %p600, %s34, 3
        %p602 = scmp.lt.s32.totalorder %s599, 1
        %s603 = scalar_select %p602, %s599, 1
        %s604 = smul.addr %s601, 4
        %s605 = sadd.s32 %s603, %s604
        %s606 = smul.addr %s605, 8
        %s607 = scalar_lea.vmem %s7, %s606
        %p608 = pneg %p226
        %p609 = pneg %p223
        %p610 = pneg %p247
        %p611 = pneg %p244
        %p612 = pneg %p268
        %p613 = pneg %p265
        %p614 = pneg %p289
        %p615 = pneg %p286
        %p616 = pneg %p310
        %p617 = pneg %p307
        %p618 = pneg %p331
        %p619 = pneg %p328
        %p620 = pneg %p352
        %p621 = pneg %p349
        %p622 = pneg %p380
        %p623 = pneg %p377
        %s624 = smul.u32 2, %s35
        %p625 = scmp.lt.s32.totalorder %s34, 3
        %s626 = scalar_select %p625, %s34, 3
        %p627 = scmp.lt.s32.totalorder %s624, 1
        %s628 = scalar_select %p627, %s624, 1
        %s629 = smul.addr %s626, 2
        %s630 = sadd.s32 %s628, %s629
        %s631 = smul.addr %s630, 4
        %s632 = scalar_lea.vmem %s14, %s631
        %p633 = pneg %p408
        %p634 = pneg %p405
        %s635 = smul.u32 2, %s35
        %p636 = scmp.lt.s32.totalorder %s34, 3
        %s637 = scalar_select %p636, %s34, 3
        %p638 = scmp.lt.s32.totalorder %s635, 1
        %s639 = scalar_select %p638, %s635, 1
        %s640 = smul.addr %s637, 2
        %s641 = sadd.s32 %s639, %s640
        %s642 = smul.addr %s641, 4
        %s643 = scalar_lea.vmem %s15, %s642
        %s644 = smul.u32 2, %s35
        %p645 = scmp.lt.s32.totalorder %s34, 3
        %s646 = scalar_select %p645, %s34, 3
        %p647 = scmp.lt.s32.totalorder %s644, 1
        %s648 = scalar_select %p647, %s644, 1
        %s649 = smul.addr %s646, 2
        %s650 = sadd.s32 %s648, %s649
        %s651 = smul.addr %s650, 4
        %s652 = scalar_lea.vmem %s5, %s651
        %s653 = smul.u32 2, %s35
        %s654 = smul.u32 2, %s35
        %p655 = scmp.lt.s32.totalorder %s34, 3
        %s656 = scalar_select %p655, %s34, 3
        %p657 = scmp.lt.s32.totalorder %s654, 1
        %s658 = scalar_select %p657, %s654, 1
        %s659 = smul.addr %s656, 2
        %s660 = sadd.s32 %s658, %s659
        %s661 = smul.addr %s660, 4
        %s662 = scalar_lea.vmem %s6, %s661
        %s663 = smul.u32 2, %s35
        %s664 = smul.u32 2, %s35
        %p665 = scmp.lt.s32.totalorder %s34, 3
        %s666 = scalar_select %p665, %s34, 3
        %p667 = scmp.lt.s32.totalorder %s664, 1
        %s668 = scalar_select %p667, %s664, 1
        %s669 = smul.addr %s666, 4
        %s670 = sadd.s32 %s668, %s669
        %s671 = smul.addr %s670, 8
        %s672 = scalar_lea.vmem %s7, %s671
        %s673 = smul.u32 2, %s35
        %s674 = smul.u32 2, %s35
        %p675 = scmp.lt.s32.totalorder %s34, 3
        %s676 = scalar_select %p675, %s34, 3
        %p677 = scmp.lt.s32.totalorder %s674, 1
        %s678 = scalar_select %p677, %s674, 1
        %s679 = smul.addr %s676, 2
        %s680 = sadd.s32 %s678, %s679
        %s681 = smul.addr %s680, 4
        %s682 = scalar_lea.vmem %s14, %s681
        %s683 = smul.u32 2, %s35
        %s684 = smul.u32 2, %s35
        %p685 = scmp.lt.s32.totalorder %s34, 3
        %s686 = scalar_select %p685, %s34, 3
        %p687 = scmp.lt.s32.totalorder %s684, 1
        %s688 = scalar_select %p687, %s684, 1
        %s689 = smul.addr %s686, 2
        %s690 = sadd.s32 %s688, %s689
        %s691 = smul.addr %s690, 4
        %s692 = scalar_lea.vmem %s15, %s691
        %s693 = smul.u32 2, %s35
        %s694 = sld [smem:[#allocation2 + %s34]]
        %s695 = sld [smem:[#allocation4 + %s34]]
        %s696 = sld [smem:[#allocation6 + %s34]]
        %s697 = sld [smem:[#allocation7 + %s34]]
        %s698 = sld [smem:[#allocation9 + %s34]]
        %v699 = vld [vmem:[%s652] sm:$0x77]
        %v700 = vld [vmem:[%s662] sm:$0x77]
        %v701 = vstv %s694
        %v702 = vmul.f32 %v701, %v700
        %v703 = vadd.f32 %v699, %v702
        %704 = vst [vmem:[%s692] sm:$0x77] %v703
        %v705 = vld [vmem:[%s672] sm:$0xff]
        %v706 = vld [vmem:[%s672 + $0x8] sm:$0xff]
        %v707 = vld [vmem:[%s672 + $0x10] sm:$0x1f]
        %v708 = vld [vmem:[%s672 + $0x18] sm:$0x1f]
        %v709 = vstv %s695
        %v710 = vmul.f32 %v703, %v709
        %v711 = vmul.f32 %v705, %v709
        %v712 = vmul.f32 %v706, %v709
        %v713 = vmul.f32 %v707, %v709
        %v714 = vmul.f32 %v708, %v709
        %v715 = vld [vmem:[%s8] sm:$0xff]
        %v716 = vld [vmem:[%s8 + $0x8] sm:$0xff]
        %v717 = vld [vmem:[%s8 + $0x10] sm:$0xff]
        %v718 = vld [vmem:[%s8 + $0x18] sm:$0xff]
        %v719 = vld [vmem:[%s9] sm:$0xff]
        %v720 = vld [vmem:[%s9 + $0x8] sm:$0xff]
        %v721 = vld [vmem:[%s9 + $0x10] sm:$0xff]
        %v722 = vld [vmem:[%s9 + $0x18] sm:$0xff]
        %vm723 = vcmask 105472
        %v725 = vsel %vm723, %v719, 0
        %v728 = vsel %vm723, %v720, 0
        %v731 = vsel %vm723, %v721, 0
        %v734 = vsel %vm723, %v722, 0
        %vm736 = vcmask 1044480
        %v738 = vsel %vm736, %v713, 0
        %v741 = vsel %vm736, %v714, 0
        %743 = vmatpush.msra.mxu0 0.0
        %744 = vmatpush.msra.mxu0 0.0
        %745 = vmatpush.msra.mxu0 0.0
        %746 = vmatpush.msra.mxu0 0.0
        %747 = vmatpush.msra.mxu0 0.0
        %748 = vmatpush.msra.mxu0 0.0
        %749 = vmatpush.msra.mxu0 0.0
        %750 = vmatpush.msra.mxu0 0.0
        %751 = vmatpush.msra.mxu0 0.0
        %752 = vmatpush.msra.mxu0 0.0
        %753 = vmatpush.msra.mxu0 0.0
        %754 = vmatpush.msra.mxu0 0.0
        %755 = vmatpush.msra.mxu0 0.0
        %756 = vmatpush.msra.mxu0 0.0
        %757 = vmatpush.msra.mxu0 %v738
        %758 = vmatpush.msra.mxu0 %v711
        %759 = vmatmul.f32.gmra.mxu0 %v725
        %v760 = vpop.f32.mrf.mxu0
        %v761 = vadd.f32 0.0, %v760
        %762 = vmatmul.f32.gmra.mxu0 %v728
        %v763 = vpop.f32.mrf.mxu0
        %v764 = vadd.f32 0.0, %v763
        %765 = vmatmul.f32.gmra.mxu0 %v731
        %v766 = vpop.f32.mrf.mxu0
        %v767 = vadd.f32 0.0, %v766
        %768 = vmatmul.f32.gmra.mxu0 %v734
        %v769 = vpop.f32.mrf.mxu0
        %v770 = vadd.f32 0.0, %v769
        %771 = vdwg.mxu0
        %772 = vmatpush.msra.mxu0 0.0
        %773 = vmatpush.msra.mxu0 0.0
        %774 = vmatpush.msra.mxu0 0.0
        %775 = vmatpush.msra.mxu0 0.0
        %776 = vmatpush.msra.mxu0 0.0
        %777 = vmatpush.msra.mxu0 0.0
        %778 = vmatpush.msra.mxu0 0.0
        %779 = vmatpush.msra.mxu0 0.0
        %780 = vmatpush.msra.mxu0 0.0
        %781 = vmatpush.msra.mxu0 0.0
        %782 = vmatpush.msra.mxu0 0.0
        %783 = vmatpush.msra.mxu0 0.0
        %784 = vmatpush.msra.mxu0 0.0
        %785 = vmatpush.msra.mxu0 0.0
        %786 = vmatpush.msra.mxu0 %v741
        %787 = vmatpush.msra.mxu0 %v712
        %788 = vmatmul.f32.gmra.mxu0 %v725
        %v789 = vpop.f32.mrf.mxu0
        %v790 = vadd.f32 0.0, %v789
        %791 = vmatmul.f32.gmra.mxu0 %v728
        %v792 = vpop.f32.mrf.mxu0
        %v793 = vadd.f32 0.0, %v792
        %794 = vmatmul.f32.gmra.mxu0 %v731
        %v795 = vpop.f32.mrf.mxu0
        %v796 = vadd.f32 0.0, %v795
        %797 = vmatmul.f32.gmra.mxu0 %v734
        %v798 = vpop.f32.mrf.mxu0
        %v799 = vadd.f32 0.0, %v798
        %800 = vdwg.mxu0
        %802 = vst [vmem:[#allocation1] ss:$2 sm:$0xff] %v710
        %v803 = vld.sshfl [vmem:[#allocation1] sm:$0xff pattern:$0x75316420]
        %v804 = vld.sshfl [vmem:[#allocation1 + $0x8] sm:$0xff pattern:$0x75316420]
        %vm805 = vcmask 23552
        %v807 = vsel %vm805, %v715, 0
        %v810 = vsel %vm805, %v716, 0
        %v813 = vsel %vm805, %v717, 0
        %v816 = vsel %vm805, %v718, 0
        %vm818 = vcmask 1042432
        %v819 = vsel %vm818, %v803, 0
        %v821 = vsel %vm818, %v804, 0
        %823 = vmatpush.msra.mxu0 0.0
        %824 = vmatpush.msra.mxu0 0.0
        %825 = vmatpush.msra.mxu0 0.0
        %826 = vmatpush.msra.mxu0 0.0
        %827 = vmatpush.msra.mxu0 0.0
        %828 = vmatpush.msra.mxu0 0.0
        %829 = vmatpush.msra.mxu0 0.0
        %830 = vmatpush.msra.mxu0 0.0
        %831 = vmatpush.msra.mxu0 0.0
        %832 = vmatpush.msra.mxu0 0.0
        %833 = vmatpush.msra.mxu0 0.0
        %834 = vmatpush.msra.mxu0 0.0
        %835 = vmatpush.msra.mxu0 0.0
        %836 = vmatpush.msra.mxu0 0.0
        %837 = vmatpush.msra.mxu0 0.0
        %838 = vmatpush.msra.mxu0 %v819
        %839 = vmatmul.f32.gmra.mxu0 %v807
        %v840 = vpop.f32.mrf.mxu0
        %v841 = vadd.f32 %v761, %v840
        %842 = vmatmul.f32.gmra.mxu0 %v810
        %v843 = vpop.f32.mrf.mxu0
        %v844 = vadd.f32 %v764, %v843
        %845 = vmatmul.f32.gmra.mxu0 %v813
        %v846 = vpop.f32.mrf.mxu0
        %v847 = vadd.f32 %v767, %v846
        %848 = vmatmul.f32.gmra.mxu0 %v816
        %v849 = vpop.f32.mrf.mxu0
        %v850 = vadd.f32 %v770, %v849
        %851 = vdwg.mxu0
        %852 = vmatpush.msra.mxu0 0.0
        %853 = vmatpush.msra.mxu0 0.0
        %854 = vmatpush.msra.mxu0 0.0
        %855 = vmatpush.msra.mxu0 0.0
        %856 = vmatpush.msra.mxu0 0.0
        %857 = vmatpush.msra.mxu0 0.0
        %858 = vmatpush.msra.mxu0 0.0
        %859 = vmatpush.msra.mxu0 0.0
        %860 = vmatpush.msra.mxu0 0.0
        %861 = vmatpush.msra.mxu0 0.0
        %862 = vmatpush.msra.mxu0 0.0
        %863 = vmatpush.msra.mxu0 0.0
        %864 = vmatpush.msra.mxu0 0.0
        %865 = vmatpush.msra.mxu0 0.0
        %866 = vmatpush.msra.mxu0 0.0
        %867 = vmatpush.msra.mxu0 %v821
        %868 = vmatmul.f32.gmra.mxu0 %v807
        %v869 = vpop.f32.mrf.mxu0
        %v870 = vadd.f32 %v790, %v869
        %871 = vmatmul.f32.gmra.mxu0 %v810
        %v872 = vpop.f32.mrf.mxu0
        %v873 = vadd.f32 %v793, %v872
        %874 = vmatmul.f32.gmra.mxu0 %v813
        %v875 = vpop.f32.mrf.mxu0
        %v876 = vadd.f32 %v796, %v875
        %877 = vmatmul.f32.gmra.mxu0 %v816
        %v878 = vpop.f32.mrf.mxu0
        %v879 = vadd.f32 %v799, %v878
        %880 = vdwg.mxu0
        %v881 = vld [vmem:[%s11] sm:$0xff]
        %v882 = vld [vmem:[%s11 + $0x8] sm:$0xff]
        %v883 = vld [vmem:[%s11 + $0x10] sm:$0xff]
        %v884 = vld [vmem:[%s11 + $0x18] sm:$0xff]
        %v885 = vld [vmem:[%s10] sm:$0xff]
        %v886 = vld [vmem:[%s10 + $0x8] sm:$0xff]
        %v887 = vld [vmem:[%s10 + $0x10] sm:$0xff]
        %v888 = vld [vmem:[%s10 + $0x18] sm:$0xff]
        %v889 = vstv %s698
        %v890 = vmul.f32 %v889, %v885
        %v891 = vmul.f32 %v889, %v886
        %v892 = vmul.f32 %v889, %v887
        %v893 = vmul.f32 %v889, %v888
        %v894 = vadd.f32 %v881, %v890
        %v895 = vadd.f32 %v882, %v891
        %v896 = vadd.f32 %v883, %v892
        %v897 = vadd.f32 %v884, %v893
        %899 = vset.pattern.permute.xlu0 0
        %900 = vperm.xlu0 %899, %v894
        %v901 = vpop.permute.xlu0 %900
        %904 = vset.pattern.permute.xlu0 0
        %905 = vperm.xlu0 %904, %v895
        %v906 = vpop.permute.xlu0 %905
        %909 = vset.pattern.permute.xlu0 0
        %910 = vperm.xlu0 %909, %v896
        %v911 = vpop.permute.xlu0 %910
        %914 = vset.pattern.permute.xlu0 0
        %915 = vperm.xlu0 %914, %v897
        %v916 = vpop.permute.xlu0 %915
        %v918 = vadd.f32 %v841, %v901
        %v919 = vadd.f32 %v870, %v901
        %v920 = vadd.f32 %v844, %v906
        %v921 = vadd.f32 %v873, %v906
        %v922 = vadd.f32 %v847, %v911
        %v923 = vadd.f32 %v876, %v911
        %v924 = vadd.f32 %v850, %v916
        %v925 = vadd.f32 %v879, %v916
        %v926 = vmax.f32 %v918, 0.0
        %v927 = vmax.f32 %v919, 0.0
        %v928 = vmax.f32 %v920, 0.0
        %v929 = vmax.f32 %v921, 0.0
        %v930 = vmax.f32 %v922, 0.0
        %v931 = vmax.f32 %v923, 0.0
        %v932 = vmax.f32 %v924, 0.0
        %v933 = vmax.f32 %v925, 0.0
        %v934 = vld [vmem:[%s12] sm:$0x7]
        %v935 = vld [vmem:[%s13] sm:$0x7]
        %937 = vset.pattern.permute.xlu0 0
        %938 = vperm.xlu0 %937, %v935
        %v939 = vpop.permute.xlu0 %938
        %vm941 = vcmask 261120
        %v943 = vsel %vm941, %v934, 0
        %945 = vmatpush.msra.mxu0 0.0
        %946 = vmatpush.msra.mxu0 0.0
        %947 = vmatpush.msra.mxu0 0.0
        %948 = vmatpush.msra.mxu0 0.0
        %949 = vmatpush.msra.mxu0 0.0
        %950 = vmatpush.msra.mxu0 0.0
        %951 = vmatpush.msra.mxu0 0.0
        %952 = vmatpush.msra.mxu0 0.0
        %953 = vmatpush.msra.mxu0 0.0
        %954 = vmatpush.msra.mxu0 0.0
        %955 = vmatpush.msra.mxu0 0.0
        %956 = vmatpush.msra.mxu0 0.0
        %957 = vmatpush.msra.mxu0 %v932
        %958 = vmatpush.msra.mxu0 %v930
        %959 = vmatpush.msra.mxu0 %v928
        %960 = vmatpush.msra.mxu0 %v926
        %961 = vmatmul.f32.gmra.mxu0 %v943
        %v962 = vpop.f32.mrf.mxu0
        %v963 = vadd.f32 %v939, %v962
        %964 = vdwg.mxu0
        %965 = vmatpush.msra.mxu0 0.0
        %966 = vmatpush.msra.mxu0 0.0
        %967 = vmatpush.msra.mxu0 0.0
        %968 = vmatpush.msra.mxu0 0.0
        %969 = vmatpush.msra.mxu0 0.0
        %970 = vmatpush.msra.mxu0 0.0
        %971 = vmatpush.msra.mxu0 0.0
        %972 = vmatpush.msra.mxu0 0.0
        %973 = vmatpush.msra.mxu0 0.0
        %974 = vmatpush.msra.mxu0 0.0
        %975 = vmatpush.msra.mxu0 0.0
        %976 = vmatpush.msra.mxu0 0.0
        %977 = vmatpush.msra.mxu0 %v933
        %978 = vmatpush.msra.mxu0 %v931
        %979 = vmatpush.msra.mxu0 %v929
        %980 = vmatpush.msra.mxu0 %v927
        %981 = vmatmul.f32.gmra.mxu0 %v943
        %v982 = vpop.f32.mrf.mxu0
        %v983 = vadd.f32 %v939, %v982
        %984 = vdwg.mxu0
        %v985 = vstv %s696
        %v986 = vmul.f32 %v985, %v703
        %v987 = vstv %s697
        %v988 = vmul.f32 %v987, %v963
        %v989 = vmul.f32 %v987, %v983
        %v992 = vrot.slane %v989, 4
        %vm993 = vcmask 1043456
        %v994 = vsel %vm993, %v988, %v992
        %v996 = vadd.f32 %v986, %v994
        %997 = vst [vmem:[%s682] sm:$0x77] %v996
        %s998 = smul.u32 2, %s35
        %p999 = scmp.lt.s32.totalorder %s34, 3
        %s1000 = scalar_select %p999, %s34, 3
        %p1001 = scmp.lt.s32.totalorder %s998, 1
        %s1002 = scalar_select %p1001, %s998, 1
        %s1003 = smul.addr %s1000, 2
        %s1004 = sadd.s32 %s1002, %s1003
        %s1005 = smul.addr %s1004, 4
        %s1006 = scalar_lea.vmem %s14, %s1005
        %s1007 = smul.u32 2, %s35
        %p1008 = scmp.lt.s32.totalorder %s34, 3
        %s1009 = scalar_select %p1008, %s34, 3
        %p1010 = scmp.lt.s32.totalorder %s1007, 1
        %s1011 = scalar_select %p1010, %s1007, 1
        %s1012 = smul.addr %s1009, 2
        %s1013 = sadd.s32 %s1011, %s1012
        %s1014 = smul.addr %s1013, 4
        %s1015 = scalar_lea.vmem %s15, %s1014
        // Predicated region
        $region97: #{genvs_forward.5} parent=75 // pred_check
          %p1016 = pneg %p377
        $region98: #{genvs_forward.5} parent=75 // pred_check_branch
          %1018 = sbr.rel (%p1016) target = $region100
        $region99: #{genvs_forward.5} parent=75 // pred_region
          %s1019 = smul.u32 2, %s35
        $region100: #{genvs_forward.5} parent=75 // pred_fallthru
          _
        // Predicated region
        $region101: #{genvs_forward.5} parent=75 // pred_check
          %p1020 = pneg %p405
        $region102: #{genvs_forward.5} parent=75 // pred_check_branch
          %1022 = sbr.rel (%p1020) target = $region104
        $region103: #{genvs_forward.5} parent=75 // pred_region
          %s1023 = smul.u32 2, %s35
        $region104: #{genvs_forward.5} parent=75 // pred_fallthru
          _
      $region76: #{genvs_forward.5} parent=5 // pred_fallthru
        _
      %p1024 = scmp.le.s32.totalorder 2, %s25
      // Predicated region
      $region105: #{genvs_forward.5} parent=5 // pred_check
        %p1025 = pneg %p1024
      $region106: #{genvs_forward.5} parent=5 // pred_check_branch
        %1027 = sbr.rel (%p1025) target = $region108
      $region107: #{genvs_forward.5} parent=5 // pred_region
        %s1028 = ssub.s32 %s25, 2
        // Predicated region
        $region109: #{genvs_forward.5} parent=107 // pred_check
          %p1029 = pneg %p383
        $region110: #{genvs_forward.5} parent=107 // pred_check_branch
          %1031 = sbr.rel (%p1029) target = $region112
        $region111: #{genvs_forward.5} parent=107 // pred_region
          %s1032 = smul.u32 2, %s37
          %p1033 = scmp.lt.s32.totalorder %s36, 3
          %s1034 = scalar_select %p1033, %s36, 3
          %p1035 = scmp.lt.s32.totalorder %s1032, 1
          %s1036 = scalar_select %p1035, %s1032, 1
          %s1037 = smul.addr %s1034, 2
          %s1038 = sadd.s32 %s1036, %s1037
          %s1039 = smul.addr %s1038, 4
          %s1040 = scalar_lea.vmem %s14, %s1039
        $region112: #{genvs_forward.5} parent=107 // pred_fallthru
          _
        // Predicated region
        $region113: #{genvs_forward.5} parent=107 // pred_check
          %p1041 = pneg %p411
        $region114: #{genvs_forward.5} parent=107 // pred_check_branch
          %1043 = sbr.rel (%p1041) target = $region116
        $region115: #{genvs_forward.5} parent=107 // pred_region
          %s1044 = smul.u32 2, %s37
          %p1045 = scmp.lt.s32.totalorder %s36, 3
          %s1046 = scalar_select %p1045, %s36, 3
          %p1047 = scmp.lt.s32.totalorder %s1044, 1
          %s1048 = scalar_select %p1047, %s1044, 1
          %s1049 = smul.addr %s1046, 2
          %s1050 = sadd.s32 %s1048, %s1049
          %s1051 = smul.addr %s1050, 4
          %s1052 = scalar_lea.vmem %s15, %s1051
        $region116: #{genvs_forward.5} parent=107 // pred_fallthru
          _
      $region108: #{genvs_forward.5} parent=5 // pred_fallthru
        _
    $region6: #{genvs_forward.5} parent=1 // loop_footer
      %s29 = sadd.s32 1, %s25
    $region7: #{genvs_forward.5} parent=1 // loop_footer_branch
      %24 = sbr.rel target = $region3
    $region8: #{genvs_forward.5} parent=1 // loop_exit
      _
    %1053 = vsyncpa [#allocation3], 1
    %s1054 = scalar_lea.sflag [#allocation3], 1
    %1055 = vsyncpa %s1054, 1
    %1056 = vsyncpa [#allocation5], 1
    %1057 = vsyncpa [#allocation8], 1

</llo_original>
